<compile_context>
chip_gen: v5e
topology: v5e:2x2
jax: 0.10.0
libtpu: 0.0.40
codegen_flags: <defaults>
</compile_context>

<pallas_src>
import jax
import jax.numpy as jnp
from jax import lax
from jax.experimental import pallas as pl
from jax.experimental.pallas import tpu as pltpu


# ---------------------------------------------------------------------------
# helpers
# ---------------------------------------------------------------------------
def _round_up(x, m):
    return (x + m - 1) // m * m


def _choose_tile(hw, img_w, max_tile=1024):
    """Pixel-tile width (multiple of the halo width, >= 512 when the image is
    large enough) and the halo width (>= 2*W + 2 pixels, multiple of 128)."""
    halo = _round_up(2 * img_w + 2, 128)
    cap = max(halo, (max_tile // halo) * halo)
    if hw <= cap:                       # a single tile covers the whole image
        return _round_up(hw, halo), halo
    t = cap                             # prefer a divisor of hw (zero padding)
    while t >= max(512, halo):
        if hw % t == 0:
            return t, halo
        t -= halo
    return cap, halo                    # padded tail tile (still >= 512 lanes)


# ---------------------------------------------------------------------------
# Fused kernel: main path + shortcut + residual + 3x3 side conv + softmax.
# Channels-first compute layout: per sample, (C, pixels) slabs with the pixel
# axis on the lanes.  Each grid step handles one (sample, pixel-tile) block
# plus a small halo so d never touches HBM.
# ---------------------------------------------------------------------------
def fused_forward(xm, xs, p, *, tile_px, halo_px, img_w, cside):
    """xm: (N, Cin, L) f32, xs: (N, Cout, L) f32, L a multiple of tile_px."""
    N, cin, L = xm.shape
    cout = xs.shape[1]
    cpad = p["w3"].shape[0]                  # Cout padded to a multiple of 8
    assert L % tile_px == 0 and tile_px % halo_px == 0 and halo_px % 128 == 0
    num_tiles = L // tile_px
    r = tile_px // halo_px                   # halo blocks per tile
    tw = tile_px + halo_px                   # in-kernel slab width
    offs = tuple(kh * img_w + kw for kh in range(3) for kw in range(3))

    def kernel(xt_ref, xh_ref, st_ref, sh_ref,
               w1c_ref, t1c_ref, w2_ref, t2_ref, w3_ref, t3_ref,
               ws_ref, ts_ref, y_ref, ys_ref):
        # input slabs = current tile + halo (first halo_px pixels of next tile)
        xb = jnp.concatenate([xt_ref[...].astype(jnp.bfloat16),
                              xh_ref[...].astype(jnp.bfloat16)], axis=1)
        xsd = jnp.concatenate([st_ref[...], sh_ref[...]], axis=1)    # (Cout, tw)

        # conv1 + shortcut conv in ONE MXU pass (BN scale pre-folded in weights)
        z = jnp.dot(w1c_ref[...], xb,
                    preferred_element_type=jnp.float32) + t1c_ref[...]
        h1 = jnp.maximum(z[:cpad], 0.0).astype(jnp.bfloat16)         # (cpad, tw)
        h2 = jnp.maximum(
            jnp.dot(w2_ref[...], h1, preferred_element_type=jnp.float32)
            + t2_ref[...], 0.0).astype(jnp.bfloat16)                 # (2cpad, tw)
        y_main = jnp.dot(w3_ref[...], h2,
                         preferred_element_type=jnp.float32) + t3_ref[...]
        d = y_main[:cout] - xsd                                      # (Cout, tw)
        y_ref[...] = (d + z[cpad:cpad + cout])[:, :tile_px]

        # 3x3 "valid" side conv on the in-VMEM d slab: one stacked-tap matmul,
        # then static lane rolls + accumulate.  Slab columns beyond tile_px
        # only feed output positions the caller slices away.
        taps = jnp.dot(ws_ref[...], d.astype(jnp.bfloat16),
                       preferred_element_type=jnp.float32)           # (9*Cs, tw)
        acc = None
        for k, off in enumerate(offs):
            tap = taps[k * cside:(k + 1) * cside]
            if off:
                tap = pltpu.roll(tap, shift=tw - off, axis=1)
            acc = tap if acc is None else acc + tap
        logits = acc + ts_ref[...]                                   # (Cside, tw)
        m = jnp.max(logits, axis=0, keepdims=True)
        e = jnp.exp(logits - m)
        ys_ref[...] = (e * pl.reciprocal(jnp.sum(e, axis=0, keepdims=True),
                                         approx=True))[:, :tile_px]

    # halo = first halo_px pixels of the next tile; clamped for the last tile
    # (whose valid outputs never need it) so every block stays in bounds.
    def halo_idx(n, t):
        return (n, 0, jnp.minimum(t + 1, num_tiles - 1) * r)

    def const(a):
        return pl.BlockSpec(a.shape, lambda n, t: (0,) * a.ndim)

    y, ys = pl.pallas_call(
        kernel,
        out_shape=(jax.ShapeDtypeStruct((N, cout, L), jnp.float32),
                   jax.ShapeDtypeStruct((N, cside, L), jnp.float32)),
        grid_spec=pltpu.PrefetchScalarGridSpec(
            num_scalar_prefetch=0,
            grid=(N, num_tiles),
            in_specs=[
                pl.BlockSpec((None, cin, tile_px), lambda n, t: (n, 0, t)),
                pl.BlockSpec((None, cin, halo_px), halo_idx),
                pl.BlockSpec((None, cout, tile_px), lambda n, t: (n, 0, t)),
                pl.BlockSpec((None, cout, halo_px), halo_idx),
                const(p["w1c"]), const(p["t1c"]),
                const(p["w2"]), const(p["t2"]),
                const(p["w3"]), const(p["t3"]),
                const(p["w_side"]), const(p["t_side"])],
            out_specs=[
                pl.BlockSpec((None, cout, tile_px), lambda n, t: (n, 0, t)),
                pl.BlockSpec((None, cside, tile_px), lambda n, t: (n, 0, t))]),
        compiler_params=pltpu.CompilerParams(
            dimension_semantics=("parallel", "parallel"),
            # explicit budget: a few MiB/step even at the largest tile, well
            # under v7x's 64 MiB physical VMEM (portable across generations).
            vmem_limit_bytes=32 * 1024 * 1024),
    )(xm, xm, xs, xs,
      p["w1c"], p["t1c"], p["w2"], p["t2"], p["w3"], p["t3"],
      p["w_side"], p["t_side"])
    return y, ys


# ---------------------------------------------------------------------------
# Forward wrapper (no NCHW transposes; reshapes are free, padding only for
# awkward H*W that has no decent divisor tile).
# ---------------------------------------------------------------------------
def conv_block4_forward(x_main, x_side, packed, *, max_pixel_tile=1024):
    N, cin, H, W = x_main.shape
    cout = x_side.shape[1]
    cside = packed["t_side"].shape[0]
    hw = H * W

    tile_px, halo_px = _choose_tile(hw, W, max_pixel_tile)
    num_tiles = -(-hw // tile_px)
    L = num_tiles * tile_px

    xm = x_main.reshape(N, cin, hw)           # pure reshapes of NCHW
    xs = x_side.reshape(N, cout, hw)
    if L != hw:                               # only for awkward H*W
        xm = jnp.pad(xm, ((0, 0), (0, 0), (0, L - hw)))
        xs = jnp.pad(xs, ((0, 0), (0, 0), (0, L - hw)))

    y_flat, ys_flat = fused_forward(xm, xs, packed, tile_px=tile_px,
                                    halo_px=halo_px, img_w=W, cside=cside)

    y = y_flat[:, :, :hw].reshape(N, cout, H, W)
    y_side = ys_flat[:, :, :hw].reshape(N, cside, H, W)[:, :, :H - 2, :W - 2]
    return y, y_side


# ---------------------------------------------------------------------------
# Parameters: raw (PyTorch-like) -> folded eval-mode BN -> kernel-ready packing
# ---------------------------------------------------------------------------
def make_raw_params(in_ch, out_ch, seed=0):
    cside = out_ch // 15
    key = jax.random.PRNGKey(seed)
    ks = iter(jax.random.split(key, 40))

    def w(shape):
        return 0.1 * jax.random.normal(next(ks), shape, jnp.float32)

    def bn(c):
        return dict(
            gamma=1.0 + 0.1 * jax.random.normal(next(ks), (c,), jnp.float32),
            beta=0.1 * jax.random.normal(next(ks), (c,), jnp.float32),
            mean=0.1 * jax.random.normal(next(ks), (c,), jnp.float32),
            var=0.5 + jnp.abs(jax.random.normal(next(ks), (c,), jnp.float32)))

    return dict(
        w1=w((out_ch, in_ch)), b1=w((out_ch,)), bn1=bn(out_ch),
        w2=w((2 * out_ch, out_ch)), b2=w((2 * out_ch,)), bn2=bn(2 * out_ch),
        w3=w((out_ch, 2 * out_ch)), b3=w((out_ch,)), bn3=bn(out_ch),
        wc=w((out_ch, in_ch)), bc=w((out_ch,)), bnc=bn(out_ch),
        ws=w((cside, out_ch, 3, 3)), bs=w((cside,)), bns=bn(cside))


def _fold(w_, b_, bn_, eps=1e-5):
    """Eval-mode BN folded into the conv: scaled weight + per-channel shift."""
    scale = bn_["gamma"] / jnp.sqrt(bn_["var"] + eps)
    shift = bn_["beta"] + (b_ - bn_["mean"]) * scale
    w_scaled = w_ * scale.reshape((-1,) + (1,) * (w_.ndim - 1))
    return w_scaled, shift


def fold_params(raw):
    f = {}
    f["w1"], f["t1"] = _fold(raw["w1"], raw["b1"], raw["bn1"])
    f["w2"], f["t2"] = _fold(raw["w2"], raw["b2"], raw["bn2"])
    f["w3"], f["t3"] = _fold(raw["w3"], raw["b3"], raw["bn3"])
    f["wc"], f["tc"] = _fold(raw["wc"], raw["bc"], raw["bnc"])
    f["ws"], f["ts"] = _fold(raw["ws"], raw["bs"], raw["bns"])
    return f


def pack_params(folded):
    """Kernel-ready params: BN-scale-folded bf16 weights padded to multiples of
    8 sublanes, conv1 + shortcut packed into one matrix (aligned split point),
    9 side-conv taps stacked into one (9*Cside, Cout) matrix."""
    cout, cin = folded["w1"].shape
    c2 = folded["w2"].shape[0]
    cside = folded["ws"].shape[0]
    cpad = _round_up(cout, 8)
    c2pad = _round_up(c2, 8)

    w1c = jnp.zeros((2 * cpad, cin), jnp.float32)
    w1c = w1c.at[:cout].set(folded["w1"]).at[cpad:cpad + cout].set(folded["wc"])
    t1c = jnp.zeros((2 * cpad, 1), jnp.float32)
    t1c = (t1c.at[:cout, 0].set(folded["t1"])
              .at[cpad:cpad + cout, 0].set(folded["tc"]))

    w2 = jnp.zeros((c2pad, cpad), jnp.float32).at[:c2, :cout].set(folded["w2"])
    t2 = jnp.zeros((c2pad, 1), jnp.float32).at[:c2, 0].set(folded["t2"])
    w3 = jnp.zeros((cpad, c2pad), jnp.float32).at[:cout, :c2].set(folded["w3"])
    t3 = jnp.zeros((cpad, 1), jnp.float32).at[:cout, 0].set(folded["t3"])

    # tap k = kh*3 + kw is the (Cside, Cout) matrix ws[:, :, kh, kw]
    w_side = jnp.transpose(folded["ws"], (2, 3, 0, 1)).reshape(9 * cside, cout)

    return dict(
        w1c=w1c.astype(jnp.bfloat16), t1c=t1c,
        w2=w2.astype(jnp.bfloat16), t2=t2,
        w3=w3.astype(jnp.bfloat16), t3=t3,
        w_side=w_side.astype(jnp.bfloat16), t_side=folded["ts"][:, None])


# ---------------------------------------------------------------------------
# Pure-JAX reference (same bf16-operand / f32-accumulate / scale-folded policy)
# ---------------------------------------------------------------------------
def reference_forward(x_main, x_side, folded):
    q = lambda a: a.astype(jnp.bfloat16).astype(jnp.float32)

    def conv1x1(x, w, t):
        return jnp.einsum('oc,nchw->nohw', q(w), q(x)) + t[None, :, None, None]

    h1 = jnp.maximum(conv1x1(x_main, folded["w1"], folded["t1"]), 0.0)
    h2 = jnp.maximum(conv1x1(h1, folded["w2"], folded["t2"]), 0.0)
    y_main = conv1x1(h2, folded["w3"], folded["t3"])
    y_conv = conv1x1(x_main, folded["wc"], folded["tc"])
    d = y_main - x_side
    y = d + y_conv
    conv = lax.conv_general_dilated(q(d), q(folded["ws"]), (1, 1), 'VALID',
                                    dimension_numbers=('NCHW', 'OIHW', 'NCHW'))
    y_side = jax.nn.softmax(conv + folded["ts"][None, :, None, None], axis=1)
    return y, y_side


if __name__ == "__main__":
    N, in_ch, out_ch, H, W = 2, 4, 30, 16, 16     # out_ch >= 15 -> side >= 1 ch
    key = jax.random.PRNGKey(0)
    kx, ks2 = jax.random.split(key)
    x_main = jax.random.normal(kx, (N, in_ch, H, W), jnp.float32)
    x_side = jax.random.normal(ks2, (N, out_ch, H, W), jnp.float32)

    raw = make_raw_params(in_ch, out_ch, seed=0)
    folded = fold_params(raw)
    packed = pack_params(folded)

    fwd = jax.jit(conv_block4_forward)
    y, y_side = fwd(x_main, x_side, packed)
    jax.block_until_ready((y, y_side))

    assert y.shape == (N, out_ch, H, W)
    assert y_side.shape == (N, out_ch // 15, H - 2, W - 2)

    # softmax over the channel dim sums to ~1 (approx EUP reciprocal)
    assert bool(jnp.all(jnp.abs(jnp.sum(y_side, axis=1) - 1.0) < 2e-2))

    # correctness vs a pure-JAX reference with the same operand-dtype policy
    y_ref, y_side_ref = reference_forward(x_main, x_side, folded)
    err_y = float(jnp.max(jnp.abs(y - y_ref)))
    err_s = float(jnp.max(jnp.abs(y_side - y_side_ref)))
    assert err_y < 3e-2, f"main path mismatch: {err_y}"
    assert err_s < 2e-2, f"side path mismatch: {err_s}"

    print("KERNEL_OK")
</pallas_src>

<mosaic_0001>
module attributes {stable_mosaic.version = 11 : i64} {
  func.func @kernel(%arg0: i32, %arg1: i32, %arg2: memref<1x4x256xf32, #tpu.memory_space<vmem>>, %arg3: memref<1x4x128xf32, #tpu.memory_space<vmem>>, %arg4: memref<1x30x256xf32, #tpu.memory_space<vmem>>, %arg5: memref<1x30x128xf32, #tpu.memory_space<vmem>>, %arg6: memref<64x4xbf16, #tpu.memory_space<vmem>>, %arg7: memref<64x1xf32, #tpu.memory_space<vmem>>, %arg8: memref<64x32xbf16, #tpu.memory_space<vmem>>, %arg9: memref<64x1xf32, #tpu.memory_space<vmem>>, %arg10: memref<32x64xbf16, #tpu.memory_space<vmem>>, %arg11: memref<32x1xf32, #tpu.memory_space<vmem>>, %arg12: memref<18x30xbf16, #tpu.memory_space<vmem>>, %arg13: memref<2x1xf32, #tpu.memory_space<vmem>>, %arg14: memref<1x30x256xf32, #tpu.memory_space<vmem>>, %arg15: memref<1x2x256xf32, #tpu.memory_space<vmem>>) attributes {dimension_semantics = [#tpu.dimension_semantics<parallel>, #tpu.dimension_semantics<parallel>], iteration_bounds = array<i64: 2, 1>, scalar_prefetch = 0 : i64, scratch_operands = 0 : i64, tpu.core_type = #tpu.core_type<tc>, window_params = [{transform_indices = @transform_0, window_bounds = array<i64: 1, 4, 256>}, {transform_indices = @transform_1, window_bounds = array<i64: 1, 4, 128>}, {transform_indices = @transform_2, window_bounds = array<i64: 1, 30, 256>}, {transform_indices = @transform_3, window_bounds = array<i64: 1, 30, 128>}, {pipeline_mode = #tpu.pipeline_mode<synchronous>, transform_indices = @transform_4, window_bounds = array<i64: 64, 4>}, {pipeline_mode = #tpu.pipeline_mode<synchronous>, transform_indices = @transform_5, window_bounds = array<i64: 64, 1>}, {pipeline_mode = #tpu.pipeline_mode<synchronous>, transform_indices = @transform_6, window_bounds = array<i64: 64, 32>}, {pipeline_mode = #tpu.pipeline_mode<synchronous>, transform_indices = @transform_7, window_bounds = array<i64: 64, 1>}, {pipeline_mode = #tpu.pipeline_mode<synchronous>, transform_indices = @transform_8, window_bounds = array<i64: 32, 64>}, {pipeline_mode = #tpu.pipeline_mode<synchronous>, transform_indices = @transform_9, window_bounds = array<i64: 32, 1>}, {pipeline_mode = #tpu.pipeline_mode<synchronous>, transform_indices = @transform_10, window_bounds = array<i64: 18, 30>}, {pipeline_mode = #tpu.pipeline_mode<synchronous>, transform_indices = @transform_11, window_bounds = array<i64: 2, 1>}, {transform_indices = @transform_12, window_bounds = array<i64: 1, 30, 256>}, {transform_indices = @transform_13, window_bounds = array<i64: 1, 2, 256>}]} {
    %c0 = arith.constant 0 : index
    %c0_0 = arith.constant 0 : index
    %c0_1 = arith.constant 0 : index
    %0 = vector.load %arg2[%c0, %c0_0, %c0_1] : memref<1x4x256xf32, #tpu.memory_space<vmem>>, vector<1x4x256xf32>
    %1 = vector.shape_cast %0 : vector<1x4x256xf32> to vector<4x256xf32>
    %2 = arith.truncf %1 : vector<4x256xf32> to vector<4x256xbf16>
    %c0_2 = arith.constant 0 : index
    %c0_3 = arith.constant 0 : index
    %c0_4 = arith.constant 0 : index
    %3 = vector.load %arg3[%c0_2, %c0_3, %c0_4] : memref<1x4x128xf32, #tpu.memory_space<vmem>>, vector<1x4x128xf32>
    %4 = vector.shape_cast %3 : vector<1x4x128xf32> to vector<4x128xf32>
    %5 = arith.truncf %4 : vector<4x128xf32> to vector<4x128xbf16>
    %6 = tpu.concatenate %2, %5 in 1 : vector<4x256xbf16>, vector<4x128xbf16> -> vector<4x384xbf16>
    %c0_5 = arith.constant 0 : index
    %c0_6 = arith.constant 0 : index
    %c0_7 = arith.constant 0 : index
    %7 = vector.load %arg4[%c0_5, %c0_6, %c0_7] : memref<1x30x256xf32, #tpu.memory_space<vmem>>, vector<1x30x256xf32>
    %8 = vector.shape_cast %7 : vector<1x30x256xf32> to vector<30x256xf32>
    %c0_8 = arith.constant 0 : index
    %c0_9 = arith.constant 0 : index
    %c0_10 = arith.constant 0 : index
    %9 = vector.load %arg5[%c0_8, %c0_9, %c0_10] : memref<1x30x128xf32, #tpu.memory_space<vmem>>, vector<1x30x128xf32>
    %10 = vector.shape_cast %9 : vector<1x30x128xf32> to vector<30x128xf32>
    %11 = tpu.concatenate %8, %10 in 1 : vector<30x256xf32>, vector<30x128xf32> -> vector<30x384xf32>
    %c0_11 = arith.constant 0 : index
    %c0_12 = arith.constant 0 : index
    %12 = vector.load %arg6[%c0_11, %c0_12] : memref<64x4xbf16, #tpu.memory_space<vmem>>, vector<64x4xbf16>
    %cst = arith.constant dense<0.000000e+00> : vector<64x384xf32>
    %13 = tpu.matmul %12, %6, %cst {dimension_numbers = #tpu.dot_dimension_numbers<[1], [0], [0], [1], [0, 0, 1, 1], [], []>} : vector<64x4xbf16>, vector<4x384xbf16>, vector<64x384xf32> -> vector<64x384xf32>
    %c0_13 = arith.constant 0 : index
    %c0_14 = arith.constant 0 : index
    %14 = vector.load %arg7[%c0_13, %c0_14] : memref<64x1xf32, #tpu.memory_space<vmem>>, vector<64x1xf32>
    %15 = vector.broadcast %14 : vector<64x1xf32> to vector<64x384xf32>
    %16 = arith.addf %13, %15 : vector<64x384xf32>
    %17 = vector.extract_strided_slice %16 {offsets = [0, 0], sizes = [32, 384], strides = [1, 1]} : vector<64x384xf32> to vector<32x384xf32>
    %cst_15 = arith.constant 0.000000e+00 : f32
    %18 = vector.broadcast %cst_15 : f32 to vector<32x384xf32>
    %19 = arith.maximumf %17, %18 : vector<32x384xf32>
    %20 = arith.truncf %19 : vector<32x384xf32> to vector<32x384xbf16>
    %c0_16 = arith.constant 0 : index
    %c0_17 = arith.constant 0 : index
    %21 = vector.load %arg8[%c0_16, %c0_17] : memref<64x32xbf16, #tpu.memory_space<vmem>>, vector<64x32xbf16>
    %cst_18 = arith.constant dense<0.000000e+00> : vector<64x384xf32>
    %22 = tpu.matmul %21, %20, %cst_18 {dimension_numbers = #tpu.dot_dimension_numbers<[1], [0], [0], [1], [0, 0, 1, 1], [], []>} : vector<64x32xbf16>, vector<32x384xbf16>, vector<64x384xf32> -> vector<64x384xf32>
    %c0_19 = arith.constant 0 : index
    %c0_20 = arith.constant 0 : index
    %23 = vector.load %arg9[%c0_19, %c0_20] : memref<64x1xf32, #tpu.memory_space<vmem>>, vector<64x1xf32>
    %24 = vector.broadcast %23 : vector<64x1xf32> to vector<64x384xf32>
    %25 = arith.addf %22, %24 : vector<64x384xf32>
    %cst_21 = arith.constant 0.000000e+00 : f32
    %26 = vector.broadcast %cst_21 : f32 to vector<64x384xf32>
    %27 = arith.maximumf %25, %26 : vector<64x384xf32>
    %28 = arith.truncf %27 : vector<64x384xf32> to vector<64x384xbf16>
    %c0_22 = arith.constant 0 : index
    %c0_23 = arith.constant 0 : index
    %29 = vector.load %arg10[%c0_22, %c0_23] : memref<32x64xbf16, #tpu.memory_space<vmem>>, vector<32x64xbf16>
    %cst_24 = arith.constant dense<0.000000e+00> : vector<32x384xf32>
    %30 = tpu.matmul %29, %28, %cst_24 {dimension_numbers = #tpu.dot_dimension_numbers<[1], [0], [0], [1], [0, 0, 1, 1], [], []>} : vector<32x64xbf16>, vector<64x384xbf16>, vector<32x384xf32> -> vector<32x384xf32>
    %c0_25 = arith.constant 0 : index
    %c0_26 = arith.constant 0 : index
    %31 = vector.load %arg11[%c0_25, %c0_26] : memref<32x1xf32, #tpu.memory_space<vmem>>, vector<32x1xf32>
    %32 = vector.broadcast %31 : vector<32x1xf32> to vector<32x384xf32>
    %33 = arith.addf %30, %32 : vector<32x384xf32>
    %34 = vector.extract_strided_slice %33 {offsets = [0, 0], sizes = [30, 384], strides = [1, 1]} : vector<32x384xf32> to vector<30x384xf32>
    %35 = arith.subf %34, %11 : vector<30x384xf32>
    %36 = vector.extract_strided_slice %16 {offsets = [32, 0], sizes = [30, 384], strides = [1, 1]} : vector<64x384xf32> to vector<30x384xf32>
    %37 = arith.addf %35, %36 : vector<30x384xf32>
    %38 = vector.extract_strided_slice %37 {offsets = [0, 0], sizes = [30, 256], strides = [1, 1]} : vector<30x384xf32> to vector<30x256xf32>
    %c0_27 = arith.constant 0 : index
    %c0_28 = arith.constant 0 : index
    %c0_29 = arith.constant 0 : index
    %39 = vector.load %arg14[%c0_27, %c0_28, %c0_29] : memref<1x30x256xf32, #tpu.memory_space<vmem>>, vector<1x30x256xf32>
    %40 = vector.shape_cast %39 : vector<1x30x256xf32> to vector<30x256xf32>
    %41 = vector.shape_cast %38 : vector<30x256xf32> to vector<1x30x256xf32>
    tpu.vector_store %arg14[%c0_27, %c0_28, %c0_29], %41 {strides = array<i32>} : memref<1x30x256xf32, #tpu.memory_space<vmem>>, vector<1x30x256xf32>,
    %c0_30 = arith.constant 0 : index
    %c0_31 = arith.constant 0 : index
    %42 = vector.load %arg12[%c0_30, %c0_31] : memref<18x30xbf16, #tpu.memory_space<vmem>>, vector<18x30xbf16>
    %43 = arith.truncf %35 : vector<30x384xf32> to vector<30x384xbf16>
    %cst_32 = arith.constant dense<0.000000e+00> : vector<18x384xf32>
    %44 = tpu.matmul %42, %43, %cst_32 {dimension_numbers = #tpu.dot_dimension_numbers<[1], [0], [0], [1], [0, 0, 1, 1], [], []>} : vector<18x30xbf16>, vector<30x384xbf16>, vector<18x384xf32> -> vector<18x384xf32>
    %45 = vector.extract_strided_slice %44 {offsets = [0, 0], sizes = [2, 384], strides = [1, 1]} : vector<18x384xf32> to vector<2x384xf32>
    %46 = vector.extract_strided_slice %44 {offsets = [2, 0], sizes = [2, 384], strides = [1, 1]} : vector<18x384xf32> to vector<2x384xf32>
    %c383_i32 = arith.constant 383 : i32
    %47 = tpu.dynamic_rotate %46 by %c383_i32 dim 1 : vector<2x384xf32>, i32 -> vector<2x384xf32>
    %48 = arith.addf %45, %47 : vector<2x384xf32>
    %49 = vector.extract_strided_slice %44 {offsets = [4, 0], sizes = [2, 384], strides = [1, 1]} : vector<18x384xf32> to vector<2x384xf32>
    %c382_i32 = arith.constant 382 : i32
    %50 = tpu.dynamic_rotate %49 by %c382_i32 dim 1 : vector<2x384xf32>, i32 -> vector<2x384xf32>
    %51 = arith.addf %48, %50 : vector<2x384xf32>
    %52 = vector.extract_strided_slice %44 {offsets = [6, 0], sizes = [2, 384], strides = [1, 1]} : vector<18x384xf32> to vector<2x384xf32>
    %c368_i32 = arith.constant 368 : i32
    %53 = tpu.dynamic_rotate %52 by %c368_i32 dim 1 : vector<2x384xf32>, i32 -> vector<2x384xf32>
    %54 = arith.addf %51, %53 : vector<2x384xf32>
    %55 = vector.extract_strided_slice %44 {offsets = [8, 0], sizes = [2, 384], strides = [1, 1]} : vector<18x384xf32> to vector<2x384xf32>
    %c367_i32 = arith.constant 367 : i32
    %56 = tpu.dynamic_rotate %55 by %c367_i32 dim 1 : vector<2x384xf32>, i32 -> vector<2x384xf32>
    %57 = arith.addf %54, %56 : vector<2x384xf32>
    %58 = vector.extract_strided_slice %44 {offsets = [10, 0], sizes = [2, 384], strides = [1, 1]} : vector<18x384xf32> to vector<2x384xf32>
    %c366_i32 = arith.constant 366 : i32
    %59 = tpu.dynamic_rotate %58 by %c366_i32 dim 1 : vector<2x384xf32>, i32 -> vector<2x384xf32>
    %60 = arith.addf %57, %59 : vector<2x384xf32>
    %61 = vector.extract_strided_slice %44 {offsets = [12, 0], sizes = [2, 384], strides = [1, 1]} : vector<18x384xf32> to vector<2x384xf32>
    %c352_i32 = arith.constant 352 : i32
    %62 = tpu.dynamic_rotate %61 by %c352_i32 dim 1 : vector<2x384xf32>, i32 -> vector<2x384xf32>
    %63 = arith.addf %60, %62 : vector<2x384xf32>
    %64 = vector.extract_strided_slice %44 {offsets = [14, 0], sizes = [2, 384], strides = [1, 1]} : vector<18x384xf32> to vector<2x384xf32>
    %c351_i32 = arith.constant 351 : i32
    %65 = tpu.dynamic_rotate %64 by %c351_i32 dim 1 : vector<2x384xf32>, i32 -> vector<2x384xf32>
    %66 = arith.addf %63, %65 : vector<2x384xf32>
    %67 = vector.extract_strided_slice %44 {offsets = [16, 0], sizes = [2, 384], strides = [1, 1]} : vector<18x384xf32> to vector<2x384xf32>
    %c350_i32 = arith.constant 350 : i32
    %68 = tpu.dynamic_rotate %67 by %c350_i32 dim 1 : vector<2x384xf32>, i32 -> vector<2x384xf32>
    %69 = arith.addf %66, %68 : vector<2x384xf32>
    %c0_33 = arith.constant 0 : index
    %c0_34 = arith.constant 0 : index
    %70 = vector.load %arg13[%c0_33, %c0_34] : memref<2x1xf32, #tpu.memory_space<vmem>>, vector<2x1xf32>
    %71 = vector.broadcast %70 : vector<2x1xf32> to vector<2x384xf32>
    %72 = arith.addf %69, %71 : vector<2x384xf32>
    %cst_35 = arith.constant dense<0xFF800000> : vector<384xf32>
    %73 = vector.multi_reduction <maximumf>, %72, %cst_35 [0] : vector<2x384xf32> to vector<384xf32>
    %74 = vector.shape_cast %73 : vector<384xf32> to vector<1x384xf32>
    %75 = vector.broadcast %74 : vector<1x384xf32> to vector<2x384xf32>
    %76 = arith.subf %72, %75 : vector<2x384xf32>
    %77 = math.exp %76 : vector<2x384xf32>
    %cst_36 = arith.constant dense<0.000000e+00> : vector<384xf32>
    %78 = vector.multi_reduction <add>, %77, %cst_36 [0] : vector<2x384xf32> to vector<384xf32>
    %79 = vector.shape_cast %78 : vector<384xf32> to vector<1x384xf32>
    %80 = tpu.reciprocal %79 {approx = true} : vector<1x384xf32> -> vector<1x384xf32>
    %81 = vector.broadcast %80 : vector<1x384xf32> to vector<2x384xf32>
    %82 = arith.mulf %77, %81 : vector<2x384xf32>
    %83 = vector.extract_strided_slice %82 {offsets = [0, 0], sizes = [2, 256], strides = [1, 1]} : vector<2x384xf32> to vector<2x256xf32>
    %c0_37 = arith.constant 0 : index
    %c0_38 = arith.constant 0 : index
    %c0_39 = arith.constant 0 : index
    %84 = vector.load %arg15[%c0_37, %c0_38, %c0_39] : memref<1x2x256xf32, #tpu.memory_space<vmem>>, vector<1x2x256xf32>
    %85 = vector.shape_cast %84 : vector<1x2x256xf32> to vector<2x256xf32>
    %86 = vector.shape_cast %83 : vector<2x256xf32> to vector<1x2x256xf32>
    tpu.vector_store %arg15[%c0_37, %c0_38, %c0_39], %86 {strides = array<i32>} : memref<1x2x256xf32, #tpu.memory_space<vmem>>, vector<1x2x256xf32>,
    return
  }
  func.func @transform_0(%arg0: i32, %arg1: i32) -> (i32, i32, i32) {
    %c0_i32 = arith.constant 0 : i32
    %c0_i32_0 = arith.constant 0 : i32
    return %arg0, %c0_i32, %arg1 : i32, i32, i32
  }
  func.func @transform_1(%arg0: i32, %arg1: i32) -> (i32, i32, i32) {
    %c1_i32 = arith.constant 1 : i32
    %0 = arith.addi %arg1, %c1_i32 : i32
    %c0_i32 = arith.constant 0 : i32
    %1 = arith.minsi %0, %c0_i32 : i32
    %c2_i32 = arith.constant 2 : i32
    %2 = arith.muli %1, %c2_i32 : i32
    %c0_i32_0 = arith.constant 0 : i32
    %c0_i32_1 = arith.constant 0 : i32
    return %arg0, %c0_i32_0, %2 : i32, i32, i32
  }
  func.func @transform_2(%arg0: i32, %arg1: i32) -> (i32, i32, i32) {
    %c0_i32 = arith.constant 0 : i32
    %c0_i32_0 = arith.constant 0 : i32
    return %arg0, %c0_i32, %arg1 : i32, i32, i32
  }
  func.func @transform_3(%arg0: i32, %arg1: i32) -> (i32, i32, i32) {
    %c1_i32 = arith.constant 1 : i32
    %0 = arith.addi %arg1, %c1_i32 : i32
    %c0_i32 = arith.constant 0 : i32
    %1 = arith.minsi %0, %c0_i32 : i32
    %c2_i32 = arith.constant 2 : i32
    %2 = arith.muli %1, %c2_i32 : i32
    %c0_i32_0 = arith.constant 0 : i32
    %c0_i32_1 = arith.constant 0 : i32
    return %arg0, %c0_i32_0, %2 : i32, i32, i32
  }
  func.func @transform_4(%arg0: i32, %arg1: i32) -> (i32, i32) {
    %c0_i32 = arith.constant 0 : i32
    %c0_i32_0 = arith.constant 0 : i32
    %c0_i32_1 = arith.constant 0 : i32
    return %c0_i32, %c0_i32_0 : i32, i32
  }
  func.func @transform_5(%arg0: i32, %arg1: i32) -> (i32, i32) {
    %c0_i32 = arith.constant 0 : i32
    %c0_i32_0 = arith.constant 0 : i32
    %c0_i32_1 = arith.constant 0 : i32
    return %c0_i32, %c0_i32_0 : i32, i32
  }
  func.func @transform_6(%arg0: i32, %arg1: i32) -> (i32, i32) {
    %c0_i32 = arith.constant 0 : i32
    %c0_i32_0 = arith.constant 0 : i32
    %c0_i32_1 = arith.constant 0 : i32
    return %c0_i32, %c0_i32_0 : i32, i32
  }
  func.func @transform_7(%arg0: i32, %arg1: i32) -> (i32, i32) {
    %c0_i32 = arith.constant 0 : i32
    %c0_i32_0 = arith.constant 0 : i32
    %c0_i32_1 = arith.constant 0 : i32
    return %c0_i32, %c0_i32_0 : i32, i32
  }
  func.func @transform_8(%arg0: i32, %arg1: i32) -> (i32, i32) {
    %c0_i32 = arith.constant 0 : i32
    %c0_i32_0 = arith.constant 0 : i32
    %c0_i32_1 = arith.constant 0 : i32
    return %c0_i32, %c0_i32_0 : i32, i32
  }
  func.func @transform_9(%arg0: i32, %arg1: i32) -> (i32, i32) {
    %c0_i32 = arith.constant 0 : i32
    %c0_i32_0 = arith.constant 0 : i32
    %c0_i32_1 = arith.constant 0 : i32
    return %c0_i32, %c0_i32_0 : i32, i32
  }
  func.func @transform_10(%arg0: i32, %arg1: i32) -> (i32, i32) {
    %c0_i32 = arith.constant 0 : i32
    %c0_i32_0 = arith.constant 0 : i32
    %c0_i32_1 = arith.constant 0 : i32
    return %c0_i32, %c0_i32_0 : i32, i32
  }
  func.func @transform_11(%arg0: i32, %arg1: i32) -> (i32, i32) {
    %c0_i32 = arith.constant 0 : i32
    %c0_i32_0 = arith.constant 0 : i32
    %c0_i32_1 = arith.constant 0 : i32
    return %c0_i32, %c0_i32_0 : i32, i32
  }
  func.func @transform_12(%arg0: i32, %arg1: i32) -> (i32, i32, i32) {
    %c0_i32 = arith.constant 0 : i32
    %c0_i32_0 = arith.constant 0 : i32
    return %arg0, %c0_i32, %arg1 : i32, i32, i32
  }
  func.func @transform_13(%arg0: i32, %arg1: i32) -> (i32, i32, i32) {
    %c0_i32 = arith.constant 0 : i32
    %c0_i32_0 = arith.constant 0 : i32
    return %arg0, %c0_i32, %arg1 : i32, i32, i32
  }
}

</mosaic_0001>

<llo_original>
// kernel: conv_block4_forward.1
$region0: #{conv_block4_forward.1}
  #allocation0 [shape = 'u32[]', space=smem, size = 0x4, offset = 0x4, fixed_abs, tag = 'smem constant byte address 0x4 - core index']
  #allocation1 [shape = 'u32[72,128]{1,0:T(1,128)}', space=vmem, size = 0x9000, scoped, tag = 'internal scratch']
  %s0 = inlined_call_operand.vmem [shape: f32[2,4,256], index: 0, kind: input, shape index: {}, may-alias: {0,1}]
  %s1 = inlined_call_operand.vmem [shape: f32[2,4,256], index: 1, kind: input, shape index: {}, may-alias: {0,1}]
  %s2 = inlined_call_operand.vmem [shape: f32[2,30,256], index: 2, kind: input, shape index: {}, may-alias: {2,3}]
  %s3 = inlined_call_operand.vmem [shape: f32[2,30,256], index: 3, kind: input, shape index: {}, may-alias: {2,3}]
  %s4 = inlined_call_operand.vmem [shape: bf16[64,4], index: 4, kind: input, shape index: {}]
  %s5 = inlined_call_operand.vmem [shape: f32[64,1], index: 5, kind: input, shape index: {}]
  %s6 = inlined_call_operand.vmem [shape: bf16[64,32], index: 6, kind: input, shape index: {}]
  %s7 = inlined_call_operand.vmem [shape: f32[64,1], index: 7, kind: input, shape index: {}]
  %s8 = inlined_call_operand.vmem [shape: bf16[32,64], index: 8, kind: input, shape index: {}]
  %s9 = inlined_call_operand.vmem [shape: f32[32,1], index: 9, kind: input, shape index: {}]
  %s10 = inlined_call_operand.vmem [shape: bf16[18,30], index: 10, kind: input, shape index: {}]
  %s11 = inlined_call_operand.vmem [shape: f32[2,1], index: 11, kind: input, shape index: {}]
  %s12 = inlined_call_operand.vmem [shape: f32[2,30,256], index: 12, kind: output, shape index: {0}]
  %s13 = inlined_call_operand.vmem [shape: f32[2,2,256], index: 13, kind: output, shape index: {1}]
  %14 = xla_tuple %s12, %s13
  %s15 = sld [smem:[#allocation0]]
  $region127: #{conv_block4_forward.1} parent=0
    _
  %s17 = ssub.s32 1, %s15
  %s18 = scalar_select 0, %s17, %s15
  $region1: #{conv_block4_forward.1} parent=0
    #allocation2 [shape = 'u8[32768]{0}', space=vmem, size = 0x8000, scoped, tag = 'input window, operand 3']
    loop: start=0, step=1, limit=4
    $region2: #{conv_block4_forward.1} parent=1 // loop_pre_header
      _
    $region3: #{conv_block4_forward.1} parent=1 // loop_header
      %s20 = sphi 0, %s24
      %p21 = scmp.ge.s32.totalorder %s20, 4
      %s27 = sphi 0, %s39
      %s28 = sphi 0, %s35
      %s29 = sphi 0, %s27
      %s30 = sphi 0, %s28
      %s31 = sphi 0, %s29
      %s32 = sphi 0, %s30
      %s44 = sphi 0, %s46
      %s47 = sphi 0, %s44
      %s48 = sphi 0, %s47
      %s64 = sphi 0, %s48
      %s80 = sphi 0, %s82
      %s83 = sphi 0, %s80
      %s84 = sphi 0, %s83
      %s100 = sphi 0, %s84
      %s108 = sphi 0, %s110
      %s111 = sphi 0, %s108
      %s112 = sphi 0, %s111
      %s128 = sphi 0, %s112
      %s144 = sphi 0, %s146
      %s147 = sphi 0, %s144
      %s148 = sphi 0, %s147
      %s164 = sphi 0, %s148
      %s168 = sphi 0, %s168
      %s170 = sphi 0, %s168
      %s171 = sphi 0, %s170
      %s185 = sphi 0, %s171
      %s189 = sphi 0, %s189
      %s191 = sphi 0, %s189
      %s192 = sphi 0, %s191
      %s206 = sphi 0, %s192
      %s210 = sphi 0, %s210
      %s212 = sphi 0, %s210
      %s213 = sphi 0, %s212
      %s227 = sphi 0, %s213
      %s231 = sphi 0, %s231
      %s233 = sphi 0, %s231
      %s234 = sphi 0, %s233
      %s248 = sphi 0, %s234
      %s252 = sphi 0, %s252
      %s254 = sphi 0, %s252
      %s255 = sphi 0, %s254
      %s269 = sphi 0, %s255
      %s273 = sphi 0, %s273
      %s275 = sphi 0, %s273
      %s276 = sphi 0, %s275
      %s290 = sphi 0, %s276
      %s294 = sphi 0, %s294
      %s296 = sphi 0, %s294
      %s297 = sphi 0, %s296
      %s311 = sphi 0, %s297
      %s315 = sphi 0, %s315
      %s317 = sphi 0, %s315
      %s318 = sphi 0, %s317
      %s332 = sphi 0, %s318
      %s340 = sphi 0, %s342
      %s343 = sphi 0, %s340
      %s344 = sphi 0, %s343
      %s360 = sphi 0, %s344
      %s368 = sphi 0, %s370
      %s371 = sphi 0, %s368
      %s372 = sphi 0, %s371
      %s388 = sphi 0, %s372
    $region4: #{conv_block4_forward.1} parent=1 // loop_header_branch
      %23 = sbr.rel (%p21) target = $region8
    $region5: #{conv_block4_forward.1} parent=1 // loop_body
      %s25 = ssub.s32 %s20, 1
      %s26 = ssub.s32 %s20, 2
      %s33 = sadd.s32 1, %s28
      %p34 = scmp.ge.s32.totalorder %s33, 1
      %s35 = scalar_select %p34, 0, %s33
      %s36 = sadd.s32 1, %s27
      %s37 = scalar_select %p34, %s36, %s27
      %p38 = scmp.ge.s32.totalorder %s37, 2
      %s39 = scalar_select %p38, 0, %s37
      %s40 = ssub.s32 %s27, %s39
      %s41 = ssub.s32 %s28, %s35
      %s42 = sor.u32 %s40, %s41
      %p43 = scmp.eq.s32.totalorder %s42, 0
      %s45 = sadd.s32 %s44, 1
      %s46 = scalar_select %p43, %s44, %s45
      %p49 = pneg %p43
      %p50 = scmp.eq.s32.totalorder %s20, 1
      %p51 = por %p49, %p50
      %p52 = scmp.ne.s32.totalorder %s44, %s47
      %p53 = scmp.eq.s32.totalorder %s20, 0
      %p54 = por %p52, %p53
      %p55 = scmp.ne.s32.totalorder %s44, %s47
      %p56 = scmp.eq.s32.totalorder %s25, 1
      %p57 = por %p55, %p56
      %p58 = scmp.ne.s32.totalorder %s47, %s48
      %p59 = scmp.eq.s32.totalorder %s25, 0
      %p60 = por %p58, %p59
      %p61 = scmp.ne.s32.totalorder %s47, %s48
      %p62 = scmp.eq.s32.totalorder %s26, 1
      %p63 = por %p61, %p62
      %p65 = scmp.ne.s32.totalorder %s48, %s64
      %p66 = scmp.eq.s32.totalorder %s26, 0
      %p67 = por %p65, %p66
      %s68 = sadd.s32 %s28, 1
      %p69 = scmp.lt.s32.totalorder %s68, 0
      %s70 = scalar_select %p69, %s68, 0
      %s71 = smul.u32 %s70, 2
      %s72 = sadd.s32 %s35, 1
      %p73 = scmp.lt.s32.totalorder %s72, 0
      %s74 = scalar_select %p73, %s72, 0
      %s75 = smul.u32 %s74, 2
      %s76 = ssub.s32 %s27, %s39
      %s77 = ssub.s32 %s71, %s75
      %s78 = sor.u32 %s76, %s77
      %p79 = scmp.eq.s32.totalorder %s78, 0
      %s81 = sadd.s32 %s80, 1
      %s82 = scalar_select %p79, %s80, %s81
      %p85 = pneg %p79
      %p86 = scmp.eq.s32.totalorder %s20, 1
      %p87 = por %p85, %p86
      %p88 = scmp.ne.s32.totalorder %s80, %s83
      %p89 = scmp.eq.s32.totalorder %s20, 0
      %p90 = por %p88, %p89
      %p91 = scmp.ne.s32.totalorder %s80, %s83
      %p92 = scmp.eq.s32.totalorder %s25, 1
      %p93 = por %p91, %p92
      %p94 = scmp.ne.s32.totalorder %s83, %s84
      %p95 = scmp.eq.s32.totalorder %s25, 0
      %p96 = por %p94, %p95
      %p97 = scmp.ne.s32.totalorder %s83, %s84
      %p98 = scmp.eq.s32.totalorder %s26, 1
      %p99 = por %p97, %p98
      %p101 = scmp.ne.s32.totalorder %s84, %s100
      %p102 = scmp.eq.s32.totalorder %s26, 0
      %p103 = por %p101, %p102
      %s104 = ssub.s32 %s27, %s39
      %s105 = ssub.s32 %s28, %s35
      %s106 = sor.u32 %s104, %s105
      %p107 = scmp.eq.s32.totalorder %s106, 0
      %s109 = sadd.s32 %s108, 1
      %s110 = scalar_select %p107, %s108, %s109
      %p113 = pneg %p107
      %p114 = scmp.eq.s32.totalorder %s20, 1
      %p115 = por %p113, %p114
      %p116 = scmp.ne.s32.totalorder %s108, %s111
      %p117 = scmp.eq.s32.totalorder %s20, 0
      %p118 = por %p116, %p117
      %p119 = scmp.ne.s32.totalorder %s108, %s111
      %p120 = scmp.eq.s32.totalorder %s25, 1
      %p121 = por %p119, %p120
      %p122 = scmp.ne.s32.totalorder %s111, %s112
      %p123 = scmp.eq.s32.totalorder %s25, 0
      %p124 = por %p122, %p123
      %p125 = scmp.ne.s32.totalorder %s111, %s112
      %p126 = scmp.eq.s32.totalorder %s26, 1
      %p127 = por %p125, %p126
      %p129 = scmp.ne.s32.totalorder %s112, %s128
      %p130 = scmp.eq.s32.totalorder %s26, 0
      %p131 = por %p129, %p130
      %s132 = sadd.s32 %s28, 1
      %p133 = scmp.lt.s32.totalorder %s132, 0
      %s134 = scalar_select %p133, %s132, 0
      %s135 = smul.u32 %s134, 2
      %s136 = sadd.s32 %s35, 1
      %p137 = scmp.lt.s32.totalorder %s136, 0
      %s138 = scalar_select %p137, %s136, 0
      %s139 = smul.u32 %s138, 2
      %s140 = ssub.s32 %s27, %s39
      %s141 = ssub.s32 %s135, %s139
      %s142 = sor.u32 %s140, %s141
      %p143 = scmp.eq.s32.totalorder %s142, 0
      %s145 = sadd.s32 %s144, 1
      %s146 = scalar_select %p143, %s144, %s145
      %p149 = pneg %p143
      %p150 = scmp.eq.s32.totalorder %s20, 1
      %p151 = por %p149, %p150
      %p152 = scmp.ne.s32.totalorder %s144, %s147
      %p153 = scmp.eq.s32.totalorder %s20, 0
      %p154 = por %p152, %p153
      %p155 = scmp.ne.s32.totalorder %s144, %s147
      %p156 = scmp.eq.s32.totalorder %s25, 1
      %p157 = por %p155, %p156
      %p158 = scmp.ne.s32.totalorder %s147, %s148
      %p159 = scmp.eq.s32.totalorder %s25, 0
      %p160 = por %p158, %p159
      %p161 = scmp.ne.s32.totalorder %s147, %s148
      %p162 = scmp.eq.s32.totalorder %s26, 1
      %p163 = por %p161, %p162
      %p165 = scmp.ne.s32.totalorder %s148, %s164
      %p166 = scmp.eq.s32.totalorder %s26, 0
      %p167 = por %p165, %p166
      %s169 = sadd.s32 %s168, 1
      %p172 = scmp.eq.s32.totalorder %s20, 1
      %p173 = scmp.ne.s32.totalorder %s168, %s170
      %p174 = scmp.eq.s32.totalorder %s20, 0
      %p175 = por %p173, %p174
      %p176 = scmp.ne.s32.totalorder %s168, %s170
      %p177 = scmp.eq.s32.totalorder %s25, 1
      %p178 = por %p176, %p177
      %p179 = scmp.ne.s32.totalorder %s170, %s171
      %p180 = scmp.eq.s32.totalorder %s25, 0
      %p181 = por %p179, %p180
      %p182 = scmp.ne.s32.totalorder %s170, %s171
      %p183 = scmp.eq.s32.totalorder %s26, 1
      %p184 = por %p182, %p183
      %p186 = scmp.ne.s32.totalorder %s171, %s185
      %p187 = scmp.eq.s32.totalorder %s26, 0
      %p188 = por %p186, %p187
      %s190 = sadd.s32 %s189, 1
      %p193 = scmp.eq.s32.totalorder %s20, 1
      %p194 = scmp.ne.s32.totalorder %s189, %s191
      %p195 = scmp.eq.s32.totalorder %s20, 0
      %p196 = por %p194, %p195
      %p197 = scmp.ne.s32.totalorder %s189, %s191
      %p198 = scmp.eq.s32.totalorder %s25, 1
      %p199 = por %p197, %p198
      %p200 = scmp.ne.s32.totalorder %s191, %s192
      %p201 = scmp.eq.s32.totalorder %s25, 0
      %p202 = por %p200, %p201
      %p203 = scmp.ne.s32.totalorder %s191, %s192
      %p204 = scmp.eq.s32.totalorder %s26, 1
      %p205 = por %p203, %p204
      %p207 = scmp.ne.s32.totalorder %s192, %s206
      %p208 = scmp.eq.s32.totalorder %s26, 0
      %p209 = por %p207, %p208
      %s211 = sadd.s32 %s210, 1
      %p214 = scmp.eq.s32.totalorder %s20, 1
      %p215 = scmp.ne.s32.totalorder %s210, %s212
      %p216 = scmp.eq.s32.totalorder %s20, 0
      %p217 = por %p215, %p216
      %p218 = scmp.ne.s32.totalorder %s210, %s212
      %p219 = scmp.eq.s32.totalorder %s25, 1
      %p220 = por %p218, %p219
      %p221 = scmp.ne.s32.totalorder %s212, %s213
      %p222 = scmp.eq.s32.totalorder %s25, 0
      %p223 = por %p221, %p222
      %p224 = scmp.ne.s32.totalorder %s212, %s213
      %p225 = scmp.eq.s32.totalorder %s26, 1
      %p226 = por %p224, %p225
      %p228 = scmp.ne.s32.totalorder %s213, %s227
      %p229 = scmp.eq.s32.totalorder %s26, 0
      %p230 = por %p228, %p229
      %s232 = sadd.s32 %s231, 1
      %p235 = scmp.eq.s32.totalorder %s20, 1
      %p236 = scmp.ne.s32.totalorder %s231, %s233
      %p237 = scmp.eq.s32.totalorder %s20, 0
      %p238 = por %p236, %p237
      %p239 = scmp.ne.s32.totalorder %s231, %s233
      %p240 = scmp.eq.s32.totalorder %s25, 1
      %p241 = por %p239, %p240
      %p242 = scmp.ne.s32.totalorder %s233, %s234
      %p243 = scmp.eq.s32.totalorder %s25, 0
      %p244 = por %p242, %p243
      %p245 = scmp.ne.s32.totalorder %s233, %s234
      %p246 = scmp.eq.s32.totalorder %s26, 1
      %p247 = por %p245, %p246
      %p249 = scmp.ne.s32.totalorder %s234, %s248
      %p250 = scmp.eq.s32.totalorder %s26, 0
      %p251 = por %p249, %p250
      %s253 = sadd.s32 %s252, 1
      %p256 = scmp.eq.s32.totalorder %s20, 1
      %p257 = scmp.ne.s32.totalorder %s252, %s254
      %p258 = scmp.eq.s32.totalorder %s20, 0
      %p259 = por %p257, %p258
      %p260 = scmp.ne.s32.totalorder %s252, %s254
      %p261 = scmp.eq.s32.totalorder %s25, 1
      %p262 = por %p260, %p261
      %p263 = scmp.ne.s32.totalorder %s254, %s255
      %p264 = scmp.eq.s32.totalorder %s25, 0
      %p265 = por %p263, %p264
      %p266 = scmp.ne.s32.totalorder %s254, %s255
      %p267 = scmp.eq.s32.totalorder %s26, 1
      %p268 = por %p266, %p267
      %p270 = scmp.ne.s32.totalorder %s255, %s269
      %p271 = scmp.eq.s32.totalorder %s26, 0
      %p272 = por %p270, %p271
      %s274 = sadd.s32 %s273, 1
      %p277 = scmp.eq.s32.totalorder %s20, 1
      %p278 = scmp.ne.s32.totalorder %s273, %s275
      %p279 = scmp.eq.s32.totalorder %s20, 0
      %p280 = por %p278, %p279
      %p281 = scmp.ne.s32.totalorder %s273, %s275
      %p282 = scmp.eq.s32.totalorder %s25, 1
      %p283 = por %p281, %p282
      %p284 = scmp.ne.s32.totalorder %s275, %s276
      %p285 = scmp.eq.s32.totalorder %s25, 0
      %p286 = por %p284, %p285
      %p287 = scmp.ne.s32.totalorder %s275, %s276
      %p288 = scmp.eq.s32.totalorder %s26, 1
      %p289 = por %p287, %p288
      %p291 = scmp.ne.s32.totalorder %s276, %s290
      %p292 = scmp.eq.s32.totalorder %s26, 0
      %p293 = por %p291, %p292
      %s295 = sadd.s32 %s294, 1
      %p298 = scmp.eq.s32.totalorder %s20, 1
      %p299 = scmp.ne.s32.totalorder %s294, %s296
      %p300 = scmp.eq.s32.totalorder %s20, 0
      %p301 = por %p299, %p300
      %p302 = scmp.ne.s32.totalorder %s294, %s296
      %p303 = scmp.eq.s32.totalorder %s25, 1
      %p304 = por %p302, %p303
      %p305 = scmp.ne.s32.totalorder %s296, %s297
      %p306 = scmp.eq.s32.totalorder %s25, 0
      %p307 = por %p305, %p306
      %p308 = scmp.ne.s32.totalorder %s296, %s297
      %p309 = scmp.eq.s32.totalorder %s26, 1
      %p310 = por %p308, %p309
      %p312 = scmp.ne.s32.totalorder %s297, %s311
      %p313 = scmp.eq.s32.totalorder %s26, 0
      %p314 = por %p312, %p313
      %s316 = sadd.s32 %s315, 1
      %p319 = scmp.eq.s32.totalorder %s20, 1
      %p320 = scmp.ne.s32.totalorder %s315, %s317
      %p321 = scmp.eq.s32.totalorder %s20, 0
      %p322 = por %p320, %p321
      %p323 = scmp.ne.s32.totalorder %s315, %s317
      %p324 = scmp.eq.s32.totalorder %s25, 1
      %p325 = por %p323, %p324
      %p326 = scmp.ne.s32.totalorder %s317, %s318
      %p327 = scmp.eq.s32.totalorder %s25, 0
      %p328 = por %p326, %p327
      %p329 = scmp.ne.s32.totalorder %s317, %s318
      %p330 = scmp.eq.s32.totalorder %s26, 1
      %p331 = por %p329, %p330
      %p333 = scmp.ne.s32.totalorder %s318, %s332
      %p334 = scmp.eq.s32.totalorder %s26, 0
      %p335 = por %p333, %p334
      %s336 = ssub.s32 %s27, %s39
      %s337 = ssub.s32 %s28, %s35
      %s338 = sor.u32 %s336, %s337
      %p339 = scmp.eq.s32.totalorder %s338, 0
      %s341 = sadd.s32 %s340, 1
      %s342 = scalar_select %p339, %s340, %s341
      %p345 = pneg %p339
      %p346 = scmp.eq.s32.totalorder %s20, 1
      %p347 = por %p345, %p346
      %p348 = scmp.ne.s32.totalorder %s340, %s343
      %p349 = scmp.eq.s32.totalorder %s20, 0
      %p350 = por %p348, %p349
      %p351 = scmp.ne.s32.totalorder %s340, %s343
      %p352 = scmp.eq.s32.totalorder %s25, 1
      %p353 = por %p351, %p352
      %p354 = scmp.ne.s32.totalorder %s343, %s344
      %p355 = scmp.eq.s32.totalorder %s25, 0
      %p356 = por %p354, %p355
      %p357 = scmp.ne.s32.totalorder %s343, %s344
      %p358 = scmp.eq.s32.totalorder %s26, 1
      %p359 = por %p357, %p358
      %p361 = scmp.ne.s32.totalorder %s344, %s360
      %p362 = scmp.eq.s32.totalorder %s26, 0
      %p363 = por %p361, %p362
      %s364 = ssub.s32 %s27, %s39
      %s365 = ssub.s32 %s28, %s35
      %s366 = sor.u32 %s364, %s365
      %p367 = scmp.eq.s32.totalorder %s366, 0
      %s369 = sadd.s32 %s368, 1
      %s370 = scalar_select %p367, %s368, %s369
      %p373 = pneg %p367
      %p374 = scmp.eq.s32.totalorder %s20, 1
      %p375 = por %p373, %p374
      %p376 = scmp.ne.s32.totalorder %s368, %s371
      %p377 = scmp.eq.s32.totalorder %s20, 0
      %p378 = por %p376, %p377
      %p379 = scmp.ne.s32.totalorder %s368, %s371
      %p380 = scmp.eq.s32.totalorder %s25, 1
      %p381 = por %p379, %p380
      %p382 = scmp.ne.s32.totalorder %s371, %s372
      %p383 = scmp.eq.s32.totalorder %s25, 0
      %p384 = por %p382, %p383
      %p385 = scmp.ne.s32.totalorder %s371, %s372
      %p386 = scmp.eq.s32.totalorder %s26, 1
      %p387 = por %p385, %p386
      %p389 = scmp.ne.s32.totalorder %s372, %s388
      %p390 = scmp.eq.s32.totalorder %s26, 0
      %p391 = por %p389, %p390
      %p392 = scmp.le.s32.totalorder 1, %s20
      %p393 = scmp.lt.s32.totalorder %s20, 3
      %p394 = pnand %p392, %p393
      %p395 = pneg %p394
      // Predicated region
      $region9: #{conv_block4_forward.1} parent=5 // pred_check
        _
      $region10: #{conv_block4_forward.1} parent=5 // pred_check_branch
        %397 = sbr.rel (%p394) target = $region12
      $region11: #{conv_block4_forward.1} parent=5 // pred_region
        %s398 = ssub.s32 %s20, 1
        // Predicated region
        $region13: #{conv_block4_forward.1} parent=11 // pred_check
          %p399 = pneg %p181
        $region14: #{conv_block4_forward.1} parent=11 // pred_check_branch
          %401 = sbr.rel (%p399) target = $region16
        $region15: #{conv_block4_forward.1} parent=11 // pred_region
          _
        $region16: #{conv_block4_forward.1} parent=11 // pred_fallthru
          _
        // Predicated region
        $region17: #{conv_block4_forward.1} parent=11 // pred_check
          %p402 = pneg %p202
        $region18: #{conv_block4_forward.1} parent=11 // pred_check_branch
          %404 = sbr.rel (%p402) target = $region20
        $region19: #{conv_block4_forward.1} parent=11 // pred_region
          _
        $region20: #{conv_block4_forward.1} parent=11 // pred_fallthru
          _
        // Predicated region
        $region21: #{conv_block4_forward.1} parent=11 // pred_check
          %p405 = pneg %p223
        $region22: #{conv_block4_forward.1} parent=11 // pred_check_branch
          %407 = sbr.rel (%p405) target = $region24
        $region23: #{conv_block4_forward.1} parent=11 // pred_region
          _
        $region24: #{conv_block4_forward.1} parent=11 // pred_fallthru
          _
        // Predicated region
        $region25: #{conv_block4_forward.1} parent=11 // pred_check
          %p408 = pneg %p244
        $region26: #{conv_block4_forward.1} parent=11 // pred_check_branch
          %410 = sbr.rel (%p408) target = $region28
        $region27: #{conv_block4_forward.1} parent=11 // pred_region
          _
        $region28: #{conv_block4_forward.1} parent=11 // pred_fallthru
          _
        // Predicated region
        $region29: #{conv_block4_forward.1} parent=11 // pred_check
          %p411 = pneg %p265
        $region30: #{conv_block4_forward.1} parent=11 // pred_check_branch
          %413 = sbr.rel (%p411) target = $region32
        $region31: #{conv_block4_forward.1} parent=11 // pred_region
          _
        $region32: #{conv_block4_forward.1} parent=11 // pred_fallthru
          _
        // Predicated region
        $region33: #{conv_block4_forward.1} parent=11 // pred_check
          %p414 = pneg %p286
        $region34: #{conv_block4_forward.1} parent=11 // pred_check_branch
          %416 = sbr.rel (%p414) target = $region36
        $region35: #{conv_block4_forward.1} parent=11 // pred_region
          _
        $region36: #{conv_block4_forward.1} parent=11 // pred_fallthru
          _
        // Predicated region
        $region37: #{conv_block4_forward.1} parent=11 // pred_check
          %p417 = pneg %p307
        $region38: #{conv_block4_forward.1} parent=11 // pred_check_branch
          %419 = sbr.rel (%p417) target = $region40
        $region39: #{conv_block4_forward.1} parent=11 // pred_region
          _
        $region40: #{conv_block4_forward.1} parent=11 // pred_fallthru
          _
        // Predicated region
        $region41: #{conv_block4_forward.1} parent=11 // pred_check
          %p420 = pneg %p328
        $region42: #{conv_block4_forward.1} parent=11 // pred_check_branch
          %422 = sbr.rel (%p420) target = $region44
        $region43: #{conv_block4_forward.1} parent=11 // pred_region
          _
        $region44: #{conv_block4_forward.1} parent=11 // pred_fallthru
          _
      $region12: #{conv_block4_forward.1} parent=5 // pred_fallthru
        _
      %p423 = scmp.lt.s32.totalorder %s20, 2
      // Predicated region
      $region45: #{conv_block4_forward.1} parent=5 // pred_check
        %p424 = pneg %p423
      $region46: #{conv_block4_forward.1} parent=5 // pred_check_branch
        %426 = sbr.rel (%p424) target = $region48
      $region47: #{conv_block4_forward.1} parent=5 // pred_region
        // Predicated region
        $region49: #{conv_block4_forward.1} parent=47 // pred_check
          %p427 = pneg %p54
        $region50: #{conv_block4_forward.1} parent=47 // pred_check_branch
          %429 = sbr.rel (%p427) target = $region52
        $region51: #{conv_block4_forward.1} parent=47 // pred_region
          %s430 = smul.u32 2, %s28
          %p431 = scmp.lt.s32.totalorder %s27, 1
          %s432 = scalar_select %p431, %s27, 1
          %p433 = scmp.lt.s32.totalorder %s430, 1
          %s434 = scalar_select %p433, %s430, 1
          %s435 = smul.addr %s432, 2
          %s436 = sadd.s32 %s434, %s435
          %s437 = smul.addr %s436, 4
          %s438 = scalar_lea.vmem %s0, %s437
          %s439 = smul.u32 2, %s28
        $region52: #{conv_block4_forward.1} parent=47 // pred_fallthru
          _
        // Predicated region
        $region53: #{conv_block4_forward.1} parent=47 // pred_check
          %p440 = pneg %p90
        $region54: #{conv_block4_forward.1} parent=47 // pred_check_branch
          %442 = sbr.rel (%p440) target = $region56
        $region55: #{conv_block4_forward.1} parent=47 // pred_region
          %s443 = sadd.s32 %s28, 1
          %p444 = scmp.lt.s32.totalorder %s443, 0
          %s445 = scalar_select %p444, %s443, 0
          %s446 = smul.u32 %s445, 2
          %p447 = scmp.lt.s32.totalorder %s27, 1
          %s448 = scalar_select %p447, %s27, 1
          %p449 = scmp.lt.s32.totalorder %s446, 1
          %s450 = scalar_select %p449, %s446, 1
          %s451 = smul.addr %s448, 2
          %s452 = sadd.s32 %s450, %s451
          %s453 = smul.addr %s452, 4
          %s454 = scalar_lea.vmem %s1, %s453
          %s455 = sadd.s32 %s28, 1
          %p456 = scmp.lt.s32.totalorder %s455, 0
          %s457 = scalar_select %p456, %s455, 0
          %s458 = smul.u32 %s457, 2
        $region56: #{conv_block4_forward.1} parent=47 // pred_fallthru
          _
        // Predicated region
        $region57: #{conv_block4_forward.1} parent=47 // pred_check
          %p459 = pneg %p118
        $region58: #{conv_block4_forward.1} parent=47 // pred_check_branch
          %461 = sbr.rel (%p459) target = $region60
        $region59: #{conv_block4_forward.1} parent=47 // pred_region
          %s462 = smul.u32 2, %s28
          %p463 = scmp.lt.s32.totalorder %s27, 1
          %s464 = scalar_select %p463, %s27, 1
          %p465 = scmp.lt.s32.totalorder %s462, 1
          %s466 = scalar_select %p465, %s462, 1
          %s467 = smul.addr %s464, 8
          %s468 = sadd.s32 %s466, %s467
          %s469 = smul.addr %s468, 8
          %s470 = scalar_lea.vmem %s2, %s469
          %s471 = smul.u32 2, %s28
        $region60: #{conv_block4_forward.1} parent=47 // pred_fallthru
          _
        // Predicated region
        $region61: #{conv_block4_forward.1} parent=47 // pred_check
          %p472 = pneg %p154
        $region62: #{conv_block4_forward.1} parent=47 // pred_check_branch
          %474 = sbr.rel (%p472) target = $region64
        $region63: #{conv_block4_forward.1} parent=47 // pred_region
          %s475 = sand.u32 %s144, 1
          %s476 = sand.u32 %s144, 1
          %s477 = smul.addr %s476, 32
          %s478 = scalar_lea.vmem [#allocation2], %s477
          %s479 = sadd.s32 %s28, 1
          %p480 = scmp.lt.s32.totalorder %s479, 0
          %s481 = scalar_select %p480, %s479, 0
          %s482 = smul.u32 %s481, 2
          %s483 = smul.addr %s27, 8
          %s484 = sadd.s32 %s482, %s483
          %s485 = smul.addr %s484, 8
          %s486 = scalar_lea.vmem %s3, %s485
          // Predicated region
          $region65: #{conv_block4_forward.1} parent=63 // pred_check
            _
          $region66: #{conv_block4_forward.1} parent=63 // pred_check_branch
            %488 = sbr.rel (0) target = $region68
          $region67: #{conv_block4_forward.1} parent=63 // pred_region
            // Predicated region
            $region69: #{conv_block4_forward.1} parent=67 // pred_check
              _
            $region70: #{conv_block4_forward.1} parent=67 // pred_check_branch
              %490 = sbr.rel (0) target = $region72
            $region71: #{conv_block4_forward.1} parent=67 // pred_region
              // Predicated region
              $region84: #{conv_block4_forward.1} parent=71 // pred_check
                _
              $region85: #{conv_block4_forward.1} parent=71 // pred_check_branch
                %512 = sbr.rel (0) target = $region87
              $region86: #{conv_block4_forward.1} parent=71 // pred_region
                loop: start=0, step=1, limit=1
                $region88: #{conv_block4_forward.1} parent=86 // loop_pre_header
                  _
                $region89: #{conv_block4_forward.1} parent=86 // loop_header
                  %s514 = sphi 0, %s518
                  %p515 = scmp.ge.s32.totalorder %s514, 1
                  %s519 = sphi %s486, %s486
                  %s520 = sphi %s478, %s478
                $region90: #{conv_block4_forward.1} parent=86 // loop_header_branch
                  %517 = sbr.rel (%p515) target = $region94
                $region91: #{conv_block4_forward.1} parent=86 // loop_body
                  %v521 = vld [vmem:[%s519] sm:$0xff]
                  %522 = vst [vmem:[%s520] sm:$0xff] %v521
                  %v523 = vld [vmem:[%s519 + $0x10] sm:$0xff]
                  %524 = vst [vmem:[%s520 + $0x8] sm:$0xff] %v523
                  %v525 = vld [vmem:[%s519 + $0x20] sm:$0xff]
                  %526 = vst [vmem:[%s520 + $0x10] sm:$0xff] %v525
                  %v527 = vld [vmem:[%s519 + $0x30] sm:$0xff]
                  %528 = vst [vmem:[%s520 + $0x18] sm:$0xff] %v527
                $region92: #{conv_block4_forward.1} parent=86 // loop_footer
                  %s518 = sadd.s32 1, %s514
                $region93: #{conv_block4_forward.1} parent=86 // loop_footer_branch
                  %513 = sbr.rel target = $region89
                $region94: #{conv_block4_forward.1} parent=86 // loop_exit
                  _
              $region87: #{conv_block4_forward.1} parent=71 // pred_fallthru
                _
              // Predicated region
              $region95: #{conv_block4_forward.1} parent=71 // pred_check
                _
              $region96: #{conv_block4_forward.1} parent=71 // pred_check_branch
                %530 = sbr.rel target = $region98
              $region97: #{conv_block4_forward.1} parent=71 // pred_region
                _
              $region98: #{conv_block4_forward.1} parent=71 // pred_fallthru
                _
            $region72: #{conv_block4_forward.1} parent=67 // pred_fallthru
              _
            // Predicated region
            $region73: #{conv_block4_forward.1} parent=67 // pred_check
              _
            $region74: #{conv_block4_forward.1} parent=67 // pred_check_branch
              %492 = sbr.rel target = $region76
            $region75: #{conv_block4_forward.1} parent=67 // pred_region
              %s494 = ssub.s32 256, 1
              loop: start=0, step=1, limit=1
              $region77: #{conv_block4_forward.1} parent=75 // loop_pre_header
                _
              $region78: #{conv_block4_forward.1} parent=75 // loop_header
                %s496 = sphi 0, %s500
                %p497 = scmp.ge.s32.totalorder %s496, 1
                %s501 = sphi %s486, %s486
                %s502 = sphi %s478, %s478
              $region79: #{conv_block4_forward.1} parent=75 // loop_header_branch
                %499 = sbr.rel (%p497) target = $region83
              $region80: #{conv_block4_forward.1} parent=75 // loop_body
                %v503 = vld [vmem:[%s501] sm:%s494]
                %504 = vst [vmem:[%s502] sm:%s494] %v503
                %v505 = vld [vmem:[%s501 + $0x10] sm:%s494]
                %506 = vst [vmem:[%s502 + $0x8] sm:%s494] %v505
                %v507 = vld [vmem:[%s501 + $0x20] sm:%s494]
                %508 = vst [vmem:[%s502 + $0x10] sm:%s494] %v507
                %v509 = vld [vmem:[%s501 + $0x30] sm:%s494]
                %510 = vst [vmem:[%s502 + $0x18] sm:%s494] %v509
              $region81: #{conv_block4_forward.1} parent=75 // loop_footer
                %s500 = sadd.s32 1, %s496
              $region82: #{conv_block4_forward.1} parent=75 // loop_footer_branch
                %495 = sbr.rel target = $region78
              $region83: #{conv_block4_forward.1} parent=75 // loop_exit
                _
            $region76: #{conv_block4_forward.1} parent=67 // pred_fallthru
              _
          $region68: #{conv_block4_forward.1} parent=63 // pred_fallthru
            _
          %531 = vnop
        $region64: #{conv_block4_forward.1} parent=47 // pred_fallthru
          _
      $region48: #{conv_block4_forward.1} parent=5 // pred_fallthru
        _
      %p532 = scmp.le.s32.totalorder 1, %s20
      %p533 = scmp.lt.s32.totalorder %s20, 3
      %p534 = pnand %p532, %p533
      %p535 = pneg %p534
      // Predicated region
      $region99: #{conv_block4_forward.1} parent=5 // pred_check
        _
      $region100: #{conv_block4_forward.1} parent=5 // pred_check_branch
        %537 = sbr.rel (%p534) target = $region102
      $region101: #{conv_block4_forward.1} parent=5 // pred_region
        %s538 = ssub.s32 %s20, 1
        %s539 = sand.u32 %s147, 1
        %s540 = sand.u32 %s147, 1
        %s541 = smul.addr %s540, 32
        %s542 = scalar_lea.vmem [#allocation2], %s541
        // Predicated region
        $region103: #{conv_block4_forward.1} parent=101 // pred_check
          %p543 = pneg %p160
        $region104: #{conv_block4_forward.1} parent=101 // pred_check_branch
          %545 = sbr.rel (%p543) target = $region106
        $region105: #{conv_block4_forward.1} parent=101 // pred_region
          _
        $region106: #{conv_block4_forward.1} parent=101 // pred_fallthru
          _
        %s546 = smul.u32 2, %s30
        %p547 = scmp.lt.s32.totalorder %s29, 1
        %s548 = scalar_select %p547, %s29, 1
        %p549 = scmp.lt.s32.totalorder %s546, 1
        %s550 = scalar_select %p549, %s546, 1
        %s551 = smul.addr %s548, 2
        %s552 = sadd.s32 %s550, %s551
        %s553 = smul.addr %s552, 4
        %s554 = scalar_lea.vmem %s0, %s553
        %p555 = pneg %p60
        %p556 = pneg %p57
        %s557 = sadd.s32 %s30, 1
        %p558 = scmp.lt.s32.totalorder %s557, 0
        %s559 = scalar_select %p558, %s557, 0
        %s560 = smul.u32 %s559, 2
        %p561 = scmp.lt.s32.totalorder %s29, 1
        %s562 = scalar_select %p561, %s29, 1
        %p563 = scmp.lt.s32.totalorder %s560, 1
        %s564 = scalar_select %p563, %s560, 1
        %s565 = smul.addr %s562, 2
        %s566 = sadd.s32 %s564, %s565
        %s567 = smul.addr %s566, 4
        %s568 = scalar_lea.vmem %s1, %s567
        %p569 = pneg %p96
        %p570 = pneg %p93
        %s571 = smul.u32 2, %s30
        %p572 = scmp.lt.s32.totalorder %s29, 1
        %s573 = scalar_select %p572, %s29, 1
        %p574 = scmp.lt.s32.totalorder %s571, 1
        %s575 = scalar_select %p574, %s571, 1
        %s576 = smul.addr %s573, 8
        %s577 = sadd.s32 %s575, %s576
        %s578 = smul.addr %s577, 8
        %s579 = scalar_lea.vmem %s2, %s578
        %p580 = pneg %p124
        %p581 = pneg %p121
        %s582 = sand.u32 %s147, 1
        %s583 = sand.u32 %s147, 1
        %s584 = smul.addr %s583, 32
        %s585 = scalar_lea.vmem [#allocation2], %s584
        %p586 = pneg %p160
        %p587 = pneg %p157
        %p588 = pneg %p181
        %p589 = pneg %p178
        %p590 = pneg %p202
        %p591 = pneg %p199
        %p592 = pneg %p223
        %p593 = pneg %p220
        %p594 = pneg %p244
        %p595 = pneg %p241
        %p596 = pneg %p265
        %p597 = pneg %p262
        %p598 = pneg %p286
        %p599 = pneg %p283
        %p600 = pneg %p307
        %p601 = pneg %p304
        %p602 = pneg %p328
        %p603 = pneg %p325
        %p604 = pneg %p356
        %p605 = pneg %p353
        %s606 = smul.u32 2, %s30
        %p607 = scmp.lt.s32.totalorder %s29, 1
        %s608 = scalar_select %p607, %s29, 1
        %p609 = scmp.lt.s32.totalorder %s606, 1
        %s610 = scalar_select %p609, %s606, 1
        %s611 = smul.addr %s608, 8
        %s612 = sadd.s32 %s610, %s611
        %s613 = smul.addr %s612, 8
        %s614 = scalar_lea.vmem %s12, %s613
        %p615 = pneg %p384
        %p616 = pneg %p381
        %s617 = smul.u32 2, %s30
        %p618 = scmp.lt.s32.totalorder %s29, 1
        %s619 = scalar_select %p618, %s29, 1
        %p620 = scmp.lt.s32.totalorder %s617, 1
        %s621 = scalar_select %p620, %s617, 1
        %s622 = smul.addr %s619, 2
        %s623 = sadd.s32 %s621, %s622
        %s624 = smul.addr %s623, 2
        %s625 = scalar_lea.vmem %s13, %s624
        %s626 = smul.u32 2, %s30
        %p627 = scmp.lt.s32.totalorder %s29, 1
        %s628 = scalar_select %p627, %s29, 1
        %p629 = scmp.lt.s32.totalorder %s626, 1
        %s630 = scalar_select %p629, %s626, 1
        %s631 = smul.addr %s628, 2
        %s632 = sadd.s32 %s630, %s631
        %s633 = smul.addr %s632, 4
        %s634 = scalar_lea.vmem %s0, %s633
        %s635 = smul.u32 2, %s30
        %s636 = sadd.s32 %s30, 1
        %p637 = scmp.lt.s32.totalorder %s636, 0
        %s638 = scalar_select %p637, %s636, 0
        %s639 = smul.u32 %s638, 2
        %p640 = scmp.lt.s32.totalorder %s29, 1
        %s641 = scalar_select %p640, %s29, 1
        %p642 = scmp.lt.s32.totalorder %s639, 1
        %s643 = scalar_select %p642, %s639, 1
        %s644 = smul.addr %s641, 2
        %s645 = sadd.s32 %s643, %s644
        %s646 = smul.addr %s645, 4
        %s647 = scalar_lea.vmem %s1, %s646
        %s648 = sadd.s32 %s30, 1
        %p649 = scmp.lt.s32.totalorder %s648, 0
        %s650 = scalar_select %p649, %s648, 0
        %s651 = smul.u32 %s650, 2
        %s652 = smul.u32 2, %s30
        %p653 = scmp.lt.s32.totalorder %s29, 1
        %s654 = scalar_select %p653, %s29, 1
        %p655 = scmp.lt.s32.totalorder %s652, 1
        %s656 = scalar_select %p655, %s652, 1
        %s657 = smul.addr %s654, 8
        %s658 = sadd.s32 %s656, %s657
        %s659 = smul.addr %s658, 8
        %s660 = scalar_lea.vmem %s2, %s659
        %s661 = smul.u32 2, %s30
        %s662 = sadd.s32 %s30, 1
        %p663 = scmp.lt.s32.totalorder %s662, 0
        %s664 = scalar_select %p663, %s662, 0
        %s665 = smul.u32 %s664, 2
        %s666 = smul.u32 2, %s30
        %p667 = scmp.lt.s32.totalorder %s29, 1
        %s668 = scalar_select %p667, %s29, 1
        %p669 = scmp.lt.s32.totalorder %s666, 1
        %s670 = scalar_select %p669, %s666, 1
        %s671 = smul.addr %s668, 8
        %s672 = sadd.s32 %s670, %s671
        %s673 = smul.addr %s672, 8
        %s674 = scalar_lea.vmem %s12, %s673
        %s675 = smul.u32 2, %s30
        %s676 = smul.u32 2, %s30
        %p677 = scmp.lt.s32.totalorder %s29, 1
        %s678 = scalar_select %p677, %s29, 1
        %p679 = scmp.lt.s32.totalorder %s676, 1
        %s680 = scalar_select %p679, %s676, 1
        %s681 = smul.addr %s678, 2
        %s682 = sadd.s32 %s680, %s681
        %s683 = smul.addr %s682, 2
        %s684 = scalar_lea.vmem %s13, %s683
        %s685 = smul.u32 2, %s30
        %v687 = vld [vmem:[%s634] sm:$0xff]
        %689 = vst [vmem:[#allocation1] ss:$2 sm:$0xff] %v687
        %v690 = vld.sshfl [vmem:[#allocation1] sm:$0xff pattern:$0x75316420]
        %v691 = vld.sshfl [vmem:[#allocation1 + $0x8] sm:$0xff pattern:$0x75316420]
        %v694 = vpack.c.bf16 %v691, %v690
        %v695 = vld [vmem:[%s647] sm:$0xf]
        %v696 = vpack.c.bf16 %v695, %v695
        %v698 = vunpack.c.l.b16 %v694
        %v699 = vunpack.c.h.b16 %v694
        %v700 = vpack.c.b16 %v698, %v698
        %v701 = vpack.c.b16 %v699, %v699
        %v702 = vld [vmem:[%s660] sm:$0xff]
        %v703 = vld [vmem:[%s660 + $0x8] sm:$0xff]
        %v704 = vld [vmem:[%s660 + $0x10] sm:$0xff]
        %v705 = vld [vmem:[%s660 + $0x18] sm:$0xff]
        %v706 = vld [vmem:[%s660 + $0x20] sm:$0xff]
        %v707 = vld [vmem:[%s660 + $0x28] sm:$0xff]
        %v708 = vld [vmem:[%s660 + $0x30] sm:$0x3f]
        %v709 = vld [vmem:[%s660 + $0x38] sm:$0x3f]
        %v710 = vld [vmem:[%s542] sm:$0xff]
        %v711 = vld [vmem:[%s542 + $0x8] sm:$0xff]
        %v712 = vld [vmem:[%s542 + $0x10] sm:$0xff]
        %v713 = vld [vmem:[%s542 + $0x18] sm:$0x3f]
        %v714 = vld [vmem:[%s4] sm:$0xf]
        %v715 = vld [vmem:[%s4 + $0x4] sm:$0xf]
        %v716 = vld [vmem:[%s4 + $0x8] sm:$0xf]
        %v717 = vld [vmem:[%s4 + $0xc] sm:$0xf]
        %v718 = vld [vmem:[%s4 + $0x10] sm:$0xf]
        %v719 = vld [vmem:[%s4 + $0x14] sm:$0xf]
        %v720 = vld [vmem:[%s4 + $0x18] sm:$0xf]
        %v721 = vld [vmem:[%s4 + $0x1c] sm:$0xf]
        %v722 = vld [vmem:[%s5] sm:$0xff]
        %v723 = vld [vmem:[%s5 + $0x8] sm:$0xff]
        %v724 = vld [vmem:[%s5 + $0x10] sm:$0xff]
        %v725 = vld [vmem:[%s5 + $0x18] sm:$0xff]
        %v726 = vld [vmem:[%s5 + $0x20] sm:$0xff]
        %v727 = vld [vmem:[%s5 + $0x28] sm:$0xff]
        %v728 = vld [vmem:[%s5 + $0x30] sm:$0xff]
        %v729 = vld [vmem:[%s5 + $0x38] sm:$0xff]
        %731 = vset.pattern.permute.xlu0 0
        %732 = vperm.xlu0 %731, %v722
        %v733 = vpop.permute.xlu0 %732
        %736 = vset.pattern.permute.xlu0 0
        %737 = vperm.xlu0 %736, %v723
        %v738 = vpop.permute.xlu0 %737
        %741 = vset.pattern.permute.xlu0 0
        %742 = vperm.xlu0 %741, %v724
        %v743 = vpop.permute.xlu0 %742
        %746 = vset.pattern.permute.xlu0 0
        %747 = vperm.xlu0 %746, %v725
        %v748 = vpop.permute.xlu0 %747
        %751 = vset.pattern.permute.xlu0 0
        %752 = vperm.xlu0 %751, %v726
        %v753 = vpop.permute.xlu0 %752
        %756 = vset.pattern.permute.xlu0 0
        %757 = vperm.xlu0 %756, %v727
        %v758 = vpop.permute.xlu0 %757
        %761 = vset.pattern.permute.xlu0 0
        %762 = vperm.xlu0 %761, %v728
        %v763 = vpop.permute.xlu0 %762
        %766 = vset.pattern.permute.xlu0 0
        %767 = vperm.xlu0 %766, %v729
        %v768 = vpop.permute.xlu0 %767
        %v778 = vunpack.c.l.b16 %v714
        %v779 = vunpack.c.l.b16 %v715
        %v780 = vunpack.c.l.b16 %v716
        %v781 = vunpack.c.l.b16 %v717
        %v782 = vunpack.c.l.b16 %v718
        %v783 = vunpack.c.l.b16 %v719
        %v784 = vunpack.c.l.b16 %v720
        %v785 = vunpack.c.l.b16 %v721
        %v786 = vpack.c.b16 %v779, %v778
        %v787 = vpack.c.b16 %v781, %v780
        %v788 = vpack.c.b16 %v783, %v782
        %v789 = vpack.c.b16 %v785, %v784
        %vm790 = vcmask 31744
        %v792 = vsel %vm790, %v786, 0
        %v795 = vsel %vm790, %v787, 0
        %v798 = vsel %vm790, %v788, 0
        %v801 = vsel %vm790, %v789, 0
        %vm803 = vcmask 1041408
        %v805 = vsel %vm803, %v700, 0
        %v808 = vsel %vm803, %v701, 0
        %v811 = vsel %vm803, %v696, 0
        %813 = vmatpush.bf16.msra.mxu0 0
        %814 = vmatpush.bf16.msra.mxu0 0
        %815 = vmatpush.bf16.msra.mxu0 0
        %816 = vmatpush.bf16.msra.mxu0 0
        %817 = vmatpush.bf16.msra.mxu0 0
        %818 = vmatpush.bf16.msra.mxu0 0
        %819 = vmatpush.bf16.msra.mxu0 0
        %820 = vmatpush.bf16.msra.mxu0 %v805
        %821 = vmatmul.bf16.gmra.mxu0 %v792
        %v822 = vpop.f32.mrf.mxu0
        %v823 = vadd.f32 %v733, %v822
        %v824 = vpop.f32.mrf.mxu0
        %v825 = vadd.f32 %v738, %v824
        %826 = vmatmul.bf16.gmra.mxu0 %v795
        %v827 = vpop.f32.mrf.mxu0
        %v828 = vadd.f32 %v743, %v827
        %v829 = vpop.f32.mrf.mxu0
        %v830 = vadd.f32 %v748, %v829
        %831 = vmatmul.bf16.gmra.mxu0 %v798
        %v832 = vpop.f32.mrf.mxu0
        %v833 = vadd.f32 %v753, %v832
        %v834 = vpop.f32.mrf.mxu0
        %v835 = vadd.f32 %v758, %v834
        %836 = vmatmul.bf16.gmra.mxu0 %v801
        %v837 = vpop.f32.mrf.mxu0
        %v838 = vadd.f32 %v763, %v837
        %v839 = vpop.f32.mrf.mxu0
        %v840 = vadd.f32 %v768, %v839
        %841 = vdwg.mxu0
        %842 = vmatpush.bf16.msra.mxu0 0
        %843 = vmatpush.bf16.msra.mxu0 0
        %844 = vmatpush.bf16.msra.mxu0 0
        %845 = vmatpush.bf16.msra.mxu0 0
        %846 = vmatpush.bf16.msra.mxu0 0
        %847 = vmatpush.bf16.msra.mxu0 0
        %848 = vmatpush.bf16.msra.mxu0 0
        %849 = vmatpush.bf16.msra.mxu0 %v808
        %850 = vmatmul.bf16.gmra.mxu0 %v792
        %v851 = vpop.f32.mrf.mxu0
        %v852 = vadd.f32 %v733, %v851
        %v853 = vpop.f32.mrf.mxu0
        %v854 = vadd.f32 %v738, %v853
        %855 = vmatmul.bf16.gmra.mxu0 %v795
        %v856 = vpop.f32.mrf.mxu0
        %v857 = vadd.f32 %v743, %v856
        %v858 = vpop.f32.mrf.mxu0
        %v859 = vadd.f32 %v748, %v858
        %860 = vmatmul.bf16.gmra.mxu0 %v798
        %v861 = vpop.f32.mrf.mxu0
        %v862 = vadd.f32 %v753, %v861
        %v863 = vpop.f32.mrf.mxu0
        %v864 = vadd.f32 %v758, %v863
        %865 = vmatmul.bf16.gmra.mxu0 %v801
        %v866 = vpop.f32.mrf.mxu0
        %v867 = vadd.f32 %v763, %v866
        %v868 = vpop.f32.mrf.mxu0
        %v869 = vadd.f32 %v768, %v868
        %870 = vdwg.mxu0
        %871 = vmatpush.bf16.msra.mxu0 0
        %872 = vmatpush.bf16.msra.mxu0 0
        %873 = vmatpush.bf16.msra.mxu0 0
        %874 = vmatpush.bf16.msra.mxu0 0
        %875 = vmatpush.bf16.msra.mxu0 0
        %876 = vmatpush.bf16.msra.mxu0 0
        %877 = vmatpush.bf16.msra.mxu0 0
        %878 = vmatpush.bf16.msra.mxu0 %v811
        %879 = vmatmul.bf16.gmra.mxu0 %v792
        %v880 = vpop.f32.mrf.mxu0
        %v881 = vadd.f32 %v733, %v880
        %v882 = vpop.f32.mrf.mxu0
        %v883 = vadd.f32 %v738, %v882
        %884 = vmatmul.bf16.gmra.mxu0 %v795
        %v885 = vpop.f32.mrf.mxu0
        %v886 = vadd.f32 %v743, %v885
        %v887 = vpop.f32.mrf.mxu0
        %v888 = vadd.f32 %v748, %v887
        %889 = vmatmul.bf16.gmra.mxu0 %v798
        %v890 = vpop.f32.mrf.mxu0
        %v891 = vpop.f32.mrf.mxu0
        %892 = vmatmul.bf16.gmra.mxu0 %v801
        %v893 = vpop.f32.mrf.mxu0
        %v894 = vpop.f32.mrf.mxu0
        %895 = vdwg.mxu0
        %v896 = vmax.f32 %v823, 0.0
        %v897 = vmax.f32 %v852, 0.0
        %v898 = vmax.f32 %v881, 0.0
        %v899 = vmax.f32 %v825, 0.0
        %v900 = vmax.f32 %v854, 0.0
        %v901 = vmax.f32 %v883, 0.0
        %v902 = vmax.f32 %v828, 0.0
        %v903 = vmax.f32 %v857, 0.0
        %v904 = vmax.f32 %v886, 0.0
        %v905 = vmax.f32 %v830, 0.0
        %v906 = vmax.f32 %v859, 0.0
        %v907 = vmax.f32 %v888, 0.0
        %v908 = vpack.c.bf16 %v899, %v896
        %v909 = vpack.c.bf16 %v900, %v897
        %v910 = vpack.c.bf16 %v901, %v898
        %v911 = vpack.c.bf16 %v905, %v902
        %v912 = vpack.c.bf16 %v906, %v903
        %v913 = vpack.c.bf16 %v907, %v904
        %v914 = vld [vmem:[%s6] sm:$0xf]
        %v915 = vld [vmem:[%s6 + $0x4] sm:$0xf]
        %v916 = vld [vmem:[%s6 + $0x8] sm:$0xf]
        %v917 = vld [vmem:[%s6 + $0xc] sm:$0xf]
        %v918 = vld [vmem:[%s6 + $0x10] sm:$0xf]
        %v919 = vld [vmem:[%s6 + $0x14] sm:$0xf]
        %v920 = vld [vmem:[%s6 + $0x18] sm:$0xf]
        %v921 = vld [vmem:[%s6 + $0x1c] sm:$0xf]
        %v922 = vld [vmem:[%s7] sm:$0xff]
        %v923 = vld [vmem:[%s7 + $0x8] sm:$0xff]
        %v924 = vld [vmem:[%s7 + $0x10] sm:$0xff]
        %v925 = vld [vmem:[%s7 + $0x18] sm:$0xff]
        %v926 = vld [vmem:[%s7 + $0x20] sm:$0xff]
        %v927 = vld [vmem:[%s7 + $0x28] sm:$0xff]
        %v928 = vld [vmem:[%s7 + $0x30] sm:$0xff]
        %v929 = vld [vmem:[%s7 + $0x38] sm:$0xff]
        %931 = vset.pattern.permute.xlu0 0
        %932 = vperm.xlu0 %931, %v922
        %v933 = vpop.permute.xlu0 %932
        %936 = vset.pattern.permute.xlu0 0
        %937 = vperm.xlu0 %936, %v923
        %v938 = vpop.permute.xlu0 %937
        %941 = vset.pattern.permute.xlu0 0
        %942 = vperm.xlu0 %941, %v924
        %v943 = vpop.permute.xlu0 %942
        %946 = vset.pattern.permute.xlu0 0
        %947 = vperm.xlu0 %946, %v925
        %v948 = vpop.permute.xlu0 %947
        %951 = vset.pattern.permute.xlu0 0
        %952 = vperm.xlu0 %951, %v926
        %v953 = vpop.permute.xlu0 %952
        %956 = vset.pattern.permute.xlu0 0
        %957 = vperm.xlu0 %956, %v927
        %v958 = vpop.permute.xlu0 %957
        %961 = vset.pattern.permute.xlu0 0
        %962 = vperm.xlu0 %961, %v928
        %v963 = vpop.permute.xlu0 %962
        %966 = vset.pattern.permute.xlu0 0
        %967 = vperm.xlu0 %966, %v929
        %v968 = vpop.permute.xlu0 %967
        %v978 = vunpack.c.l.b16 %v914
        %v979 = vunpack.c.l.b16 %v915
        %v980 = vunpack.c.l.b16 %v916
        %v981 = vunpack.c.l.b16 %v917
        %v982 = vunpack.c.l.b16 %v918
        %v983 = vunpack.c.l.b16 %v919
        %v984 = vunpack.c.l.b16 %v920
        %v985 = vunpack.c.l.b16 %v921
        %v986 = vpack.c.b16 %v979, %v978
        %v987 = vpack.c.b16 %v981, %v980
        %v988 = vpack.c.b16 %v983, %v982
        %v989 = vpack.c.b16 %v985, %v984
        %vm990 = vcmask 261120
        %v992 = vsel %vm990, %v986, 0
        %v995 = vsel %vm990, %v987, 0
        %v998 = vsel %vm990, %v988, 0
        %v1001 = vsel %vm990, %v989, 0
        %1003 = vmatpush.bf16.msra.mxu0 0
        %1004 = vmatpush.bf16.msra.mxu0 0
        %1005 = vmatpush.bf16.msra.mxu0 0
        %1006 = vmatpush.bf16.msra.mxu0 0
        %1007 = vmatpush.bf16.msra.mxu0 0
        %1008 = vmatpush.bf16.msra.mxu0 0
        %1009 = vmatpush.bf16.msra.mxu0 %v911
        %1010 = vmatpush.bf16.msra.mxu0 %v908
        %1011 = vmatmul.bf16.gmra.mxu0 %v992
        %v1012 = vpop.f32.mrf.mxu0
        %v1013 = vadd.f32 %v933, %v1012
        %v1014 = vpop.f32.mrf.mxu0
        %v1015 = vadd.f32 %v938, %v1014
        %1016 = vmatmul.bf16.gmra.mxu0 %v995
        %v1017 = vpop.f32.mrf.mxu0
        %v1018 = vadd.f32 %v943, %v1017
        %v1019 = vpop.f32.mrf.mxu0
        %v1020 = vadd.f32 %v948, %v1019
        %1021 = vmatmul.bf16.gmra.mxu0 %v998
        %v1022 = vpop.f32.mrf.mxu0
        %v1023 = vadd.f32 %v953, %v1022
        %v1024 = vpop.f32.mrf.mxu0
        %v1025 = vadd.f32 %v958, %v1024
        %1026 = vmatmul.bf16.gmra.mxu0 %v1001
        %v1027 = vpop.f32.mrf.mxu0
        %v1028 = vadd.f32 %v963, %v1027
        %v1029 = vpop.f32.mrf.mxu0
        %v1030 = vadd.f32 %v968, %v1029
        %1031 = vdwg.mxu0
        %1032 = vmatpush.bf16.msra.mxu0 0
        %1033 = vmatpush.bf16.msra.mxu0 0
        %1034 = vmatpush.bf16.msra.mxu0 0
        %1035 = vmatpush.bf16.msra.mxu0 0
        %1036 = vmatpush.bf16.msra.mxu0 0
        %1037 = vmatpush.bf16.msra.mxu0 0
        %1038 = vmatpush.bf16.msra.mxu0 %v912
        %1039 = vmatpush.bf16.msra.mxu0 %v909
        %1040 = vmatmul.bf16.gmra.mxu0 %v992
        %v1041 = vpop.f32.mrf.mxu0
        %v1042 = vadd.f32 %v933, %v1041
        %v1043 = vpop.f32.mrf.mxu0
        %v1044 = vadd.f32 %v938, %v1043
        %1045 = vmatmul.bf16.gmra.mxu0 %v995
        %v1046 = vpop.f32.mrf.mxu0
        %v1047 = vadd.f32 %v943, %v1046
        %v1048 = vpop.f32.mrf.mxu0
        %v1049 = vadd.f32 %v948, %v1048
        %1050 = vmatmul.bf16.gmra.mxu0 %v998
        %v1051 = vpop.f32.mrf.mxu0
        %v1052 = vadd.f32 %v953, %v1051
        %v1053 = vpop.f32.mrf.mxu0
        %v1054 = vadd.f32 %v958, %v1053
        %1055 = vmatmul.bf16.gmra.mxu0 %v1001
        %v1056 = vpop.f32.mrf.mxu0
        %v1057 = vadd.f32 %v963, %v1056
        %v1058 = vpop.f32.mrf.mxu0
        %v1059 = vadd.f32 %v968, %v1058
        %1060 = vdwg.mxu0
        %1061 = vmatpush.bf16.msra.mxu0 0
        %1062 = vmatpush.bf16.msra.mxu0 0
        %1063 = vmatpush.bf16.msra.mxu0 0
        %1064 = vmatpush.bf16.msra.mxu0 0
        %1065 = vmatpush.bf16.msra.mxu0 0
        %1066 = vmatpush.bf16.msra.mxu0 0
        %1067 = vmatpush.bf16.msra.mxu0 %v913
        %1068 = vmatpush.bf16.msra.mxu0 %v910
        %1069 = vmatmul.bf16.gmra.mxu0 %v992
        %v1070 = vpop.f32.mrf.mxu0
        %v1071 = vadd.f32 %v933, %v1070
        %v1072 = vpop.f32.mrf.mxu0
        %v1073 = vadd.f32 %v938, %v1072
        %1074 = vmatmul.bf16.gmra.mxu0 %v995
        %v1075 = vpop.f32.mrf.mxu0
        %v1076 = vadd.f32 %v943, %v1075
        %v1077 = vpop.f32.mrf.mxu0
        %v1078 = vadd.f32 %v948, %v1077
        %1079 = vmatmul.bf16.gmra.mxu0 %v998
        %v1080 = vpop.f32.mrf.mxu0
        %v1081 = vadd.f32 %v953, %v1080
        %v1082 = vpop.f32.mrf.mxu0
        %v1083 = vadd.f32 %v958, %v1082
        %1084 = vmatmul.bf16.gmra.mxu0 %v1001
        %v1085 = vpop.f32.mrf.mxu0
        %v1086 = vadd.f32 %v963, %v1085
        %v1087 = vpop.f32.mrf.mxu0
        %v1088 = vadd.f32 %v968, %v1087
        %1089 = vdwg.mxu0
        %v1090 = vmax.f32 %v1013, 0.0
        %v1091 = vmax.f32 %v1042, 0.0
        %v1092 = vmax.f32 %v1071, 0.0
        %v1093 = vmax.f32 %v1015, 0.0
        %v1094 = vmax.f32 %v1044, 0.0
        %v1095 = vmax.f32 %v1073, 0.0
        %v1096 = vmax.f32 %v1018, 0.0
        %v1097 = vmax.f32 %v1047, 0.0
        %v1098 = vmax.f32 %v1076, 0.0
        %v1099 = vmax.f32 %v1020, 0.0
        %v1100 = vmax.f32 %v1049, 0.0
        %v1101 = vmax.f32 %v1078, 0.0
        %v1102 = vmax.f32 %v1023, 0.0
        %v1103 = vmax.f32 %v1052, 0.0
        %v1104 = vmax.f32 %v1081, 0.0
        %v1105 = vmax.f32 %v1025, 0.0
        %v1106 = vmax.f32 %v1054, 0.0
        %v1107 = vmax.f32 %v1083, 0.0
        %v1108 = vmax.f32 %v1028, 0.0
        %v1109 = vmax.f32 %v1057, 0.0
        %v1110 = vmax.f32 %v1086, 0.0
        %v1111 = vmax.f32 %v1030, 0.0
        %v1112 = vmax.f32 %v1059, 0.0
        %v1113 = vmax.f32 %v1088, 0.0
        %v1114 = vpack.c.bf16 %v1093, %v1090
        %v1115 = vpack.c.bf16 %v1094, %v1091
        %v1116 = vpack.c.bf16 %v1095, %v1092
        %v1117 = vpack.c.bf16 %v1099, %v1096
        %v1118 = vpack.c.bf16 %v1100, %v1097
        %v1119 = vpack.c.bf16 %v1101, %v1098
        %v1120 = vpack.c.bf16 %v1105, %v1102
        %v1121 = vpack.c.bf16 %v1106, %v1103
        %v1122 = vpack.c.bf16 %v1107, %v1104
        %v1123 = vpack.c.bf16 %v1111, %v1108
        %v1124 = vpack.c.bf16 %v1112, %v1109
        %v1125 = vpack.c.bf16 %v1113, %v1110
        %v1126 = vld [vmem:[%s8] sm:$0xf]
        %v1127 = vld [vmem:[%s8 + $0x4] sm:$0xf]
        %v1128 = vld [vmem:[%s8 + $0x8] sm:$0xf]
        %v1129 = vld [vmem:[%s8 + $0xc] sm:$0xf]
        %v1130 = vld [vmem:[%s9] sm:$0xff]
        %v1131 = vld [vmem:[%s9 + $0x8] sm:$0xff]
        %v1132 = vld [vmem:[%s9 + $0x10] sm:$0xff]
        %v1133 = vld [vmem:[%s9 + $0x18] sm:$0xff]
        %1135 = vset.pattern.permute.xlu0 0
        %1136 = vperm.xlu0 %1135, %v1130
        %v1137 = vpop.permute.xlu0 %1136
        %1140 = vset.pattern.permute.xlu0 0
        %1141 = vperm.xlu0 %1140, %v1131
        %v1142 = vpop.permute.xlu0 %1141
        %1145 = vset.pattern.permute.xlu0 0
        %1146 = vperm.xlu0 %1145, %v1132
        %v1147 = vpop.permute.xlu0 %1146
        %1150 = vset.pattern.permute.xlu0 0
        %1151 = vperm.xlu0 %1150, %v1133
        %v1152 = vpop.permute.xlu0 %1151
        %v1158 = vunpack.c.l.b16 %v1126
        %v1159 = vunpack.c.l.b16 %v1127
        %v1160 = vunpack.c.l.b16 %v1128
        %v1161 = vunpack.c.l.b16 %v1129
        %v1162 = vpack.c.b16 %v1159, %v1158
        %v1163 = vpack.c.b16 %v1161, %v1160
        %vm1164 = vcmask 523264
        %v1166 = vsel %vm1164, %v1162, 0
        %v1169 = vsel %vm1164, %v1163, 0
        %1171 = vmatpush.bf16.msra.mxu0 0
        %1172 = vmatpush.bf16.msra.mxu0 0
        %1173 = vmatpush.bf16.msra.mxu0 0
        %1174 = vmatpush.bf16.msra.mxu0 0
        %1175 = vmatpush.bf16.msra.mxu0 %v1123
        %1176 = vmatpush.bf16.msra.mxu0 %v1120
        %1177 = vmatpush.bf16.msra.mxu0 %v1117
        %1178 = vmatpush.bf16.msra.mxu0 %v1114
        %1179 = vmatmul.bf16.gmra.mxu0 %v1166
        %v1180 = vpop.f32.mrf.mxu0
        %v1181 = vadd.f32 %v1137, %v1180
        %v1182 = vpop.f32.mrf.mxu0
        %v1183 = vadd.f32 %v1142, %v1182
        %1184 = vmatmul.bf16.gmra.mxu0 %v1169
        %v1185 = vpop.f32.mrf.mxu0
        %v1186 = vadd.f32 %v1147, %v1185
        %v1187 = vpop.f32.mrf.mxu0
        %v1188 = vadd.f32 %v1152, %v1187
        %1189 = vdwg.mxu0
        %1190 = vmatpush.bf16.msra.mxu0 0
        %1191 = vmatpush.bf16.msra.mxu0 0
        %1192 = vmatpush.bf16.msra.mxu0 0
        %1193 = vmatpush.bf16.msra.mxu0 0
        %1194 = vmatpush.bf16.msra.mxu0 %v1124
        %1195 = vmatpush.bf16.msra.mxu0 %v1121
        %1196 = vmatpush.bf16.msra.mxu0 %v1118
        %1197 = vmatpush.bf16.msra.mxu0 %v1115
        %1198 = vmatmul.bf16.gmra.mxu0 %v1166
        %v1199 = vpop.f32.mrf.mxu0
        %v1200 = vadd.f32 %v1137, %v1199
        %v1201 = vpop.f32.mrf.mxu0
        %v1202 = vadd.f32 %v1142, %v1201
        %1203 = vmatmul.bf16.gmra.mxu0 %v1169
        %v1204 = vpop.f32.mrf.mxu0
        %v1205 = vadd.f32 %v1147, %v1204
        %v1206 = vpop.f32.mrf.mxu0
        %v1207 = vadd.f32 %v1152, %v1206
        %1208 = vdwg.mxu0
        %1209 = vmatpush.bf16.msra.mxu0 0
        %1210 = vmatpush.bf16.msra.mxu0 0
        %1211 = vmatpush.bf16.msra.mxu0 0
        %1212 = vmatpush.bf16.msra.mxu0 0
        %1213 = vmatpush.bf16.msra.mxu0 %v1125
        %1214 = vmatpush.bf16.msra.mxu0 %v1122
        %1215 = vmatpush.bf16.msra.mxu0 %v1119
        %1216 = vmatpush.bf16.msra.mxu0 %v1116
        %1217 = vmatmul.bf16.gmra.mxu0 %v1166
        %v1218 = vpop.f32.mrf.mxu0
        %v1219 = vadd.f32 %v1137, %v1218
        %v1220 = vpop.f32.mrf.mxu0
        %v1221 = vadd.f32 %v1142, %v1220
        %1222 = vmatmul.bf16.gmra.mxu0 %v1169
        %v1223 = vpop.f32.mrf.mxu0
        %v1224 = vadd.f32 %v1147, %v1223
        %v1225 = vpop.f32.mrf.mxu0
        %v1226 = vadd.f32 %v1152, %v1225
        %1227 = vdwg.mxu0
        %v1228 = vsub.f32 %v1181, %v702
        %v1229 = vsub.f32 %v1200, %v703
        %v1230 = vsub.f32 %v1219, %v710
        %v1231 = vsub.f32 %v1183, %v704
        %v1232 = vsub.f32 %v1202, %v705
        %v1233 = vsub.f32 %v1221, %v711
        %v1234 = vsub.f32 %v1186, %v706
        %v1235 = vsub.f32 %v1205, %v707
        %v1236 = vsub.f32 %v1224, %v712
        %v1237 = vsub.f32 %v1188, %v708
        %v1238 = vsub.f32 %v1207, %v709
        %v1239 = vsub.f32 %v1226, %v713
        %v1240 = vadd.f32 %v1228, %v833
        %v1241 = vadd.f32 %v1229, %v862
        %v1242 = vadd.f32 %v1231, %v835
        %v1243 = vadd.f32 %v1232, %v864
        %v1244 = vadd.f32 %v1234, %v838
        %v1245 = vadd.f32 %v1235, %v867
        %v1246 = vadd.f32 %v1237, %v840
        %v1247 = vadd.f32 %v1238, %v869
        %1248 = vst [vmem:[%s674] sm:$0xff] %v1240
        %1249 = vst [vmem:[%s674 + $0x8] sm:$0xff] %v1241
        %1250 = vst [vmem:[%s674 + $0x10] sm:$0xff] %v1242
        %1251 = vst [vmem:[%s674 + $0x18] sm:$0xff] %v1243
        %1252 = vst [vmem:[%s674 + $0x20] sm:$0xff] %v1244
        %1253 = vst [vmem:[%s674 + $0x28] sm:$0xff] %v1245
        %1254 = vst [vmem:[%s674 + $0x30] sm:$0x3f] %v1246
        %1255 = vst [vmem:[%s674 + $0x38] sm:$0x3f] %v1247
        %v1256 = vld [vmem:[%s10] sm:$0xf]
        %v1257 = vld [vmem:[%s10 + $0x4] sm:$0xf]
        %v1258 = vld [vmem:[%s10 + $0x8] sm:$0x1]
        %v1259 = vpack.c.bf16 %v1231, %v1228
        %v1260 = vpack.c.bf16 %v1232, %v1229
        %v1261 = vpack.c.bf16 %v1233, %v1230
        %v1262 = vpack.c.bf16 %v1237, %v1234
        %v1263 = vpack.c.bf16 %v1238, %v1235
        %v1264 = vpack.c.bf16 %v1239, %v1236
        %v1268 = vunpack.c.l.b16 %v1256
        %v1269 = vunpack.c.l.b16 %v1257
        %v1270 = vunpack.c.l.b16 %v1258
        %v1271 = vpack.c.b16 %v1269, %v1268
        %v1272 = vpack.c.b16 %v1270, %v1270
        %vm1273 = vcmask 244736
        %v1275 = vsel %vm1273, %v1271, 0
        %v1278 = vsel %vm1273, %v1272, 0
        %vm1280 = vcmask 1046528
        %v1282 = vsel %vm1280, %v1262, 0
        %v1285 = vsel %vm1280, %v1263, 0
        %v1288 = vsel %vm1280, %v1264, 0
        %1290 = vmatpush.bf16.msra.mxu0 0
        %1291 = vmatpush.bf16.msra.mxu0 0
        %1292 = vmatpush.bf16.msra.mxu0 0
        %1293 = vmatpush.bf16.msra.mxu0 0
        %1294 = vmatpush.bf16.msra.mxu0 0
        %1295 = vmatpush.bf16.msra.mxu0 0
        %1296 = vmatpush.bf16.msra.mxu0 %v1282
        %1297 = vmatpush.bf16.msra.mxu0 %v1259
        %1298 = vmatmul.bf16.gmra.mxu0 %v1275
        %v1299 = vpop.f32.mrf.mxu0
        %v1300 = vadd.f32 0.0, %v1299
        %v1301 = vpop.f32.mrf.mxu0
        %v1302 = vadd.f32 0.0, %v1301
        %1303 = vmatmul.bf16.gmra.mxu0 %v1278
        %v1304 = vpop.f32.mrf.mxu0
        %v1305 = vadd.f32 0.0, %v1304
        %v1306 = vpop.f32.mrf.mxu0
        %1307 = vdwg.mxu0
        %1308 = vmatpush.bf16.msra.mxu0 0
        %1309 = vmatpush.bf16.msra.mxu0 0
        %1310 = vmatpush.bf16.msra.mxu0 0
        %1311 = vmatpush.bf16.msra.mxu0 0
        %1312 = vmatpush.bf16.msra.mxu0 0
        %1313 = vmatpush.bf16.msra.mxu0 0
        %1314 = vmatpush.bf16.msra.mxu0 %v1285
        %1315 = vmatpush.bf16.msra.mxu0 %v1260
        %1316 = vmatmul.bf16.gmra.mxu0 %v1275
        %v1317 = vpop.f32.mrf.mxu0
        %v1318 = vadd.f32 0.0, %v1317
        %v1319 = vpop.f32.mrf.mxu0
        %v1320 = vadd.f32 0.0, %v1319
        %1321 = vmatmul.bf16.gmra.mxu0 %v1278
        %v1322 = vpop.f32.mrf.mxu0
        %v1323 = vadd.f32 0.0, %v1322
        %v1324 = vpop.f32.mrf.mxu0
        %1325 = vdwg.mxu0
        %1326 = vmatpush.bf16.msra.mxu0 0
        %1327 = vmatpush.bf16.msra.mxu0 0
        %1328 = vmatpush.bf16.msra.mxu0 0
        %1329 = vmatpush.bf16.msra.mxu0 0
        %1330 = vmatpush.bf16.msra.mxu0 0
        %1331 = vmatpush.bf16.msra.mxu0 0
        %1332 = vmatpush.bf16.msra.mxu0 %v1288
        %1333 = vmatpush.bf16.msra.mxu0 %v1261
        %1334 = vmatmul.bf16.gmra.mxu0 %v1275
        %v1335 = vpop.f32.mrf.mxu0
        %v1336 = vadd.f32 0.0, %v1335
        %v1337 = vpop.f32.mrf.mxu0
        %v1338 = vadd.f32 0.0, %v1337
        %1339 = vmatmul.bf16.gmra.mxu0 %v1278
        %v1340 = vpop.f32.mrf.mxu0
        %v1341 = vadd.f32 0.0, %v1340
        %v1342 = vpop.f32.mrf.mxu0
        %1343 = vdwg.mxu0
        %v1347 = vrot.slane %v1300, 2
        %v1348 = vrot.slane %v1318, 2
        %v1349 = vrot.slane %v1336, 2
        %1353 = vrot.lane.b32.xlu0 %v1347, 127
        %v1354 = vpop.permute.xlu0 %1353
        %1355 = vrot.lane.b32.xlu0 %v1348, 127
        %v1356 = vpop.permute.xlu0 %1355
        %1357 = vrot.lane.b32.xlu0 %v1349, 127
        %v1358 = vpop.permute.xlu0 %1357
        %v1359 = vlaneseq
        %v1360 = vand.u32 %v1359, 127
        %vm1361 = vcmp.lt.s32.totalorder %v1360, 127
        %v1362 = vsel %vm1361, %v1356, %v1358
        %v1363 = vsel %vm1361, %v1354, %v1356
        %v1364 = vadd.f32 %v1300, %v1363
        %v1365 = vadd.f32 %v1318, %v1362
        %v1366 = vrot.slane %v1300, 4
        %v1367 = vrot.slane %v1318, 4
        %v1368 = vrot.slane %v1336, 4
        %1372 = vrot.lane.b32.xlu0 %v1366, 126
        %v1373 = vpop.permute.xlu0 %1372
        %1374 = vrot.lane.b32.xlu0 %v1367, 126
        %v1375 = vpop.permute.xlu0 %1374
        %1376 = vrot.lane.b32.xlu0 %v1368, 126
        %v1377 = vpop.permute.xlu0 %1376
        %vm1378 = vcmp.lt.s32.totalorder %v1360, 126
        %v1379 = vsel %vm1378, %v1375, %v1377
        %v1380 = vsel %vm1378, %v1373, %v1375
        %v1381 = vadd.f32 %v1364, %v1380
        %v1382 = vadd.f32 %v1365, %v1379
        %v1383 = vrot.slane %v1300, 6
        %v1384 = vrot.slane %v1318, 6
        %v1385 = vrot.slane %v1336, 6
        %1389 = vrot.lane.b32.xlu0 %v1383, 112
        %v1390 = vpop.permute.xlu0 %1389
        %1391 = vrot.lane.b32.xlu0 %v1384, 112
        %v1392 = vpop.permute.xlu0 %1391
        %1393 = vrot.lane.b32.xlu0 %v1385, 112
        %v1394 = vpop.permute.xlu0 %1393
        %vm1395 = vcmp.lt.s32.totalorder %v1360, 112
        %v1396 = vsel %vm1395, %v1392, %v1394
        %v1397 = vsel %vm1395, %v1390, %v1392
        %v1398 = vadd.f32 %v1381, %v1397
        %v1399 = vadd.f32 %v1382, %v1396
        %1400 = vrot.lane.b32.xlu0 %v1302, 111
        %v1401 = vpop.permute.xlu0 %1400
        %1402 = vrot.lane.b32.xlu0 %v1320, 111
        %v1403 = vpop.permute.xlu0 %1402
        %1404 = vrot.lane.b32.xlu0 %v1338, 111
        %v1405 = vpop.permute.xlu0 %1404
        %vm1406 = vcmp.lt.s32.totalorder %v1360, 111
        %v1407 = vsel %vm1406, %v1403, %v1405
        %v1408 = vsel %vm1406, %v1401, %v1403
        %v1409 = vadd.f32 %v1398, %v1408
        %v1410 = vadd.f32 %v1399, %v1407
        %v1414 = vrot.slane %v1302, 2
        %v1415 = vrot.slane %v1320, 2
        %v1416 = vrot.slane %v1338, 2
        %1420 = vrot.lane.b32.xlu0 %v1414, 110
        %v1421 = vpop.permute.xlu0 %1420
        %1422 = vrot.lane.b32.xlu0 %v1415, 110
        %v1423 = vpop.permute.xlu0 %1422
        %1424 = vrot.lane.b32.xlu0 %v1416, 110
        %v1425 = vpop.permute.xlu0 %1424
        %vm1426 = vcmp.lt.s32.totalorder %v1360, 110
        %v1427 = vsel %vm1426, %v1423, %v1425
        %v1428 = vsel %vm1426, %v1421, %v1423
        %v1429 = vadd.f32 %v1409, %v1428
        %v1430 = vadd.f32 %v1410, %v1427
        %v1431 = vrot.slane %v1302, 4
        %v1432 = vrot.slane %v1320, 4
        %v1433 = vrot.slane %v1338, 4
        %1437 = vrot.lane.b32.xlu0 %v1431, 96
        %v1438 = vpop.permute.xlu0 %1437
        %1439 = vrot.lane.b32.xlu0 %v1432, 96
        %v1440 = vpop.permute.xlu0 %1439
        %1441 = vrot.lane.b32.xlu0 %v1433, 96
        %v1442 = vpop.permute.xlu0 %1441
        %vm1443 = vcmp.lt.s32.totalorder %v1360, 96
        %v1444 = vsel %vm1443, %v1440, %v1442
        %v1445 = vsel %vm1443, %v1438, %v1440
        %v1446 = vadd.f32 %v1429, %v1445
        %v1447 = vadd.f32 %v1430, %v1444
        %v1448 = vrot.slane %v1302, 6
        %v1449 = vrot.slane %v1320, 6
        %v1450 = vrot.slane %v1338, 6
        %1454 = vrot.lane.b32.xlu0 %v1448, 95
        %v1455 = vpop.permute.xlu0 %1454
        %1456 = vrot.lane.b32.xlu0 %v1449, 95
        %v1457 = vpop.permute.xlu0 %1456
        %1458 = vrot.lane.b32.xlu0 %v1450, 95
        %v1459 = vpop.permute.xlu0 %1458
        %vm1460 = vcmp.lt.s32.totalorder %v1360, 95
        %v1461 = vsel %vm1460, %v1457, %v1459
        %v1462 = vsel %vm1460, %v1455, %v1457
        %v1463 = vadd.f32 %v1446, %v1462
        %v1464 = vadd.f32 %v1447, %v1461
        %1465 = vrot.lane.b32.xlu0 %v1305, 94
        %v1466 = vpop.permute.xlu0 %1465
        %1467 = vrot.lane.b32.xlu0 %v1323, 94
        %v1468 = vpop.permute.xlu0 %1467
        %1469 = vrot.lane.b32.xlu0 %v1341, 94
        %v1470 = vpop.permute.xlu0 %1469
        %vm1471 = vcmp.lt.s32.totalorder %v1360, 94
        %v1472 = vsel %vm1471, %v1468, %v1470
        %v1473 = vsel %vm1471, %v1466, %v1468
        %v1474 = vadd.f32 %v1463, %v1473
        %v1475 = vadd.f32 %v1464, %v1472
        %v1476 = vld [vmem:[%s11] sm:$0x3]
        %1478 = vset.pattern.permute.xlu0 0
        %1479 = vperm.xlu0 %1478, %v1476
        %v1480 = vpop.permute.xlu0 %1479
        %v1482 = vadd.f32 %v1474, %v1480
        %v1483 = vadd.f32 %v1475, %v1480
        %v1484 = vsel %vm803, %v1482, -inf
        %v1485 = vrot.slane %v1484, 4
        %v1486 = vmax.f32 %v1484, %v1485
        %v1487 = vrot.slane %v1486, 2
        %v1488 = vmax.f32 %v1486, %v1487
        %v1489 = vrot.slane %v1488, 1
        %v1490 = vmax.f32 %v1488, %v1489
        %v1491 = vsel %vm803, %v1483, -inf
        %v1492 = vrot.slane %v1491, 4
        %v1493 = vmax.f32 %v1491, %v1492
        %v1494 = vrot.slane %v1493, 2
        %v1495 = vmax.f32 %v1493, %v1494
        %v1496 = vrot.slane %v1495, 1
        %v1497 = vmax.f32 %v1495, %v1496
        %v1498 = vsub.f32 %v1482, %v1490
        %v1499 = vsub.f32 %v1483, %v1497
        %v1500 = vmul.f32 %v1498, 1.442695
        %v1501 = vpow.pop %v1500
        %v1502 = vmul.f32 %v1499, 1.442695
        %v1503 = vpow.pop %v1502
        %v1504 = vsel %vm803, %v1501, 0.0
        %v1505 = vrot.slane %v1504, 4
        %v1506 = vadd.f32 %v1504, %v1505
        %v1507 = vrot.slane %v1506, 2
        %v1508 = vadd.f32 %v1506, %v1507
        %v1509 = vrot.slane %v1508, 1
        %v1510 = vadd.f32 %v1508, %v1509
        %v1511 = vsel %vm803, %v1503, 0.0
        %v1512 = vrot.slane %v1511, 4
        %v1513 = vadd.f32 %v1511, %v1512
        %v1514 = vrot.slane %v1513, 2
        %v1515 = vadd.f32 %v1513, %v1514
        %v1516 = vrot.slane %v1515, 1
        %v1517 = vadd.f32 %v1515, %v1516
        %v1518 = vrcp.pop %v1510
        %v1519 = vrcp.pop %v1517
        %v1520 = vmul.f32 %v1501, %v1518
        %v1521 = vmul.f32 %v1503, %v1519
        %v1524 = vrot.slane %v1521, 6
        %v1525 = vsel %vm803, %v1520, %v1524
        %1527 = vst [vmem:[%s684] sm:$0xf] %v1525
        %s1528 = smul.u32 2, %s30
        %p1529 = scmp.lt.s32.totalorder %s29, 1
        %s1530 = scalar_select %p1529, %s29, 1
        %p1531 = scmp.lt.s32.totalorder %s1528, 1
        %s1532 = scalar_select %p1531, %s1528, 1
        %s1533 = smul.addr %s1530, 8
        %s1534 = sadd.s32 %s1532, %s1533
        %s1535 = smul.addr %s1534, 8
        %s1536 = scalar_lea.vmem %s12, %s1535
        %s1537 = smul.u32 2, %s30
        %p1538 = scmp.lt.s32.totalorder %s29, 1
        %s1539 = scalar_select %p1538, %s29, 1
        %p1540 = scmp.lt.s32.totalorder %s1537, 1
        %s1541 = scalar_select %p1540, %s1537, 1
        %s1542 = smul.addr %s1539, 2
        %s1543 = sadd.s32 %s1541, %s1542
        %s1544 = smul.addr %s1543, 2
        %s1545 = scalar_lea.vmem %s13, %s1544
        // Predicated region
        $region107: #{conv_block4_forward.1} parent=101 // pred_check
          %p1546 = pneg %p353
        $region108: #{conv_block4_forward.1} parent=101 // pred_check_branch
          %1548 = sbr.rel (%p1546) target = $region110
        $region109: #{conv_block4_forward.1} parent=101 // pred_region
          %s1549 = smul.u32 2, %s30
        $region110: #{conv_block4_forward.1} parent=101 // pred_fallthru
          _
        // Predicated region
        $region111: #{conv_block4_forward.1} parent=101 // pred_check
          %p1550 = pneg %p381
        $region112: #{conv_block4_forward.1} parent=101 // pred_check_branch
          %1552 = sbr.rel (%p1550) target = $region114
        $region113: #{conv_block4_forward.1} parent=101 // pred_region
          %s1553 = smul.u32 2, %s30
        $region114: #{conv_block4_forward.1} parent=101 // pred_fallthru
          _
      $region102: #{conv_block4_forward.1} parent=5 // pred_fallthru
        _
      %p1554 = scmp.le.s32.totalorder 2, %s20
      // Predicated region
      $region115: #{conv_block4_forward.1} parent=5 // pred_check
        %p1555 = pneg %p1554
      $region116: #{conv_block4_forward.1} parent=5 // pred_check_branch
        %1557 = sbr.rel (%p1555) target = $region118
      $region117: #{conv_block4_forward.1} parent=5 // pred_region
        %s1558 = ssub.s32 %s20, 2
        // Predicated region
        $region119: #{conv_block4_forward.1} parent=117 // pred_check
          %p1559 = pneg %p359
        $region120: #{conv_block4_forward.1} parent=117 // pred_check_branch
          %1561 = sbr.rel (%p1559) target = $region122
        $region121: #{conv_block4_forward.1} parent=117 // pred_region
          %s1562 = smul.u32 2, %s32
          %p1563 = scmp.lt.s32.totalorder %s31, 1
          %s1564 = scalar_select %p1563, %s31, 1
          %p1565 = scmp.lt.s32.totalorder %s1562, 1
          %s1566 = scalar_select %p1565, %s1562, 1
          %s1567 = smul.addr %s1564, 8
          %s1568 = sadd.s32 %s1566, %s1567
          %s1569 = smul.addr %s1568, 8
          %s1570 = scalar_lea.vmem %s12, %s1569
        $region122: #{conv_block4_forward.1} parent=117 // pred_fallthru
          _
        // Predicated region
        $region123: #{conv_block4_forward.1} parent=117 // pred_check
          %p1571 = pneg %p387
        $region124: #{conv_block4_forward.1} parent=117 // pred_check_branch
          %1573 = sbr.rel (%p1571) target = $region126
        $region125: #{conv_block4_forward.1} parent=117 // pred_region
          %s1574 = smul.u32 2, %s32
          %p1575 = scmp.lt.s32.totalorder %s31, 1
          %s1576 = scalar_select %p1575, %s31, 1
          %p1577 = scmp.lt.s32.totalorder %s1574, 1
          %s1578 = scalar_select %p1577, %s1574, 1
          %s1579 = smul.addr %s1576, 2
          %s1580 = sadd.s32 %s1578, %s1579
          %s1581 = smul.addr %s1580, 2
          %s1582 = scalar_lea.vmem %s13, %s1581
        $region126: #{conv_block4_forward.1} parent=117 // pred_fallthru
          _
      $region118: #{conv_block4_forward.1} parent=5 // pred_fallthru
        _
    $region6: #{conv_block4_forward.1} parent=1 // loop_footer
      %s24 = sadd.s32 1, %s20
    $region7: #{conv_block4_forward.1} parent=1 // loop_footer_branch
      %19 = sbr.rel target = $region3
    $region8: #{conv_block4_forward.1} parent=1 // loop_exit
      _

</llo_original>
